<compile_context>
chip_gen: v6e
topology: v6e:2x2x1
jax: 0.10.0
libtpu: 0.0.40
codegen_flags: <defaults>
</compile_context>

<pallas_src>
import functools
from dataclasses import dataclass
from typing import Optional

import jax
import jax.numpy as jnp
from jax import lax
from jax.experimental import pallas as pl
from jax.experimental.pallas import tpu as pltpu


# ----------------------------- config (mirrors AssistanceConfig) -------------
@dataclass
class AssistanceConfig:
    assistant_name: Optional[str] = None
    prune_nlayers: Optional[int] = None
    prune_ndist: Optional[float] = None
    prune_maxlayers: Optional[int] = None


# ----------------------------- small math helpers ----------------------------
def _layernorm(h, g, b, eps=1e-5):
    mu = jnp.mean(h, axis=-1, keepdims=True)
    var = jnp.mean((h - mu) ** 2, axis=-1, keepdims=True)
    return (h - mu) * lax.rsqrt(var + eps) * g + b


def _gelu_tanh(x):
    # GPT-2 "gelu_new" (tanh approximation), f32 on the VPU/EUP.
    c = 0.7978845608028654  # sqrt(2/pi)
    return 0.5 * x * (1.0 + jnp.tanh(c * (x + 0.044715 * x * x * x)))


# ----------------------------- the Pallas kernel ------------------------------
def _block_kernel(S, D, NH, TQ,
                  flags_ref,                                    # scalar prefetch (SMEM)
                  x_ref,
                  wq_ref, bq_ref, wk_ref, bk_ref, wv_ref, bv_ref,
                  wo_ref, bo_ref,
                  g1_ref, be1_ref, g2_ref, be2_ref,
                  w1_ref, b1_ref, w2_ref, b2_ref,
                  o_ref,
                  hmid_ref):
    HD = D // NH
    q_start = pl.multiple_of(pl.program_id(1) * TQ, TQ)
    skip_attn = flags_ref[0]
    skip_mlp = flags_ref[1]

    # ---------------- attention sublayer (skipped entirely when flagged) -----
    @pl.when(skip_attn == 0)
    def _attn():
        x_full = x_ref[0].astype(jnp.float32)                            # (S, D)
        x_q = x_ref[0, pl.ds(q_start, TQ), :].astype(jnp.float32)        # (TQ, D)

        h1_full = _layernorm(x_full, g1_ref[...], be1_ref[...])
        h1_q = _layernorm(x_q, g1_ref[...], be1_ref[...])
        h1_full_bf = h1_full.astype(jnp.bfloat16)
        h1_q_bf = h1_q.astype(jnp.bfloat16)

        # projections: bf16 MXU inputs, f32 accumulation, f32 biases
        q = jnp.dot(h1_q_bf, wq_ref[...],
                    preferred_element_type=jnp.float32) + bq_ref[...]    # (TQ, D)
        k = jnp.dot(h1_full_bf, wk_ref[...],
                    preferred_element_type=jnp.float32) + bk_ref[...]    # (S, D)
        v = jnp.dot(h1_full_bf, wv_ref[...],
                    preferred_element_type=jnp.float32) + bv_ref[...]    # (S, D)

        # batched-head layout (NH, rows, HD)
        qh = jnp.stack([q[:, h * HD:(h + 1) * HD] for h in range(NH)],
                       axis=0).astype(jnp.bfloat16)                      # (NH, TQ, HD)
        kh = jnp.stack([k[:, h * HD:(h + 1) * HD] for h in range(NH)],
                       axis=0).astype(jnp.bfloat16)                      # (NH, S, HD)
        vh = jnp.stack([v[:, h * HD:(h + 1) * HD] for h in range(NH)],
                       axis=0).astype(jnp.bfloat16)                      # (NH, S, HD)

        s = jnp.einsum("hqd,hkd->hqk", qh, kh,
                       preferred_element_type=jnp.float32)               # (NH, TQ, S)
        s = s * (1.0 / (HD ** 0.5))

        row = q_start + lax.broadcasted_iota(jnp.int32, (TQ, S), 0)
        col = lax.broadcasted_iota(jnp.int32, (TQ, S), 1)
        s = jnp.where(row >= col, s, -1e30)                              # causal mask (f32)

        s = s - jnp.max(s, axis=-1, keepdims=True)
        p = jnp.exp(s)
        p = p * pl.reciprocal(jnp.sum(p, axis=-1, keepdims=True), approx=True)

        ctx = jnp.einsum("hqk,hkd->hqd", p.astype(jnp.bfloat16), vh,
                         preferred_element_type=jnp.float32)             # (NH, TQ, HD)
        ctx2d = jnp.concatenate([ctx[h] for h in range(NH)], axis=-1)    # (TQ, D), lane dense

        attn_out = jnp.dot(ctx2d.astype(jnp.bfloat16), wo_ref[...],
                           preferred_element_type=jnp.float32) + bo_ref[...]
        hmid_ref[...] = x_q + attn_out

    @pl.when(skip_attn != 0)
    def _skip_attn():
        # nullified attention: residual passes straight through
        hmid_ref[...] = x_ref[0, pl.ds(q_start, TQ), :].astype(jnp.float32)

    # ---------------- MLP sublayer (skipped entirely when flagged) -----------
    @pl.when(skip_mlp == 0)
    def _mlp():
        h_mid = hmid_ref[...]
        h2 = _layernorm(h_mid, g2_ref[...], be2_ref[...])
        m = jnp.dot(h2.astype(jnp.bfloat16), w1_ref[...],
                    preferred_element_type=jnp.float32) + b1_ref[...]
        m = _gelu_tanh(m)
        m = jnp.dot(m.astype(jnp.bfloat16), w2_ref[...],
                    preferred_element_type=jnp.float32) + b2_ref[...]
        o_ref[0] = (h_mid + m).astype(o_ref.dtype)

    @pl.when(skip_mlp != 0)
    def _skip_mlp():
        o_ref[0] = hmid_ref[...].astype(o_ref.dtype)


# ----------------------------- wrapper ----------------------------------------
def skippable_block_forward(x, params, skip_flags, num_heads, q_tile=128):
    """Runs the (possibly sublayer-nullified) transformer block on TPU."""
    B, S, D = x.shape
    H = params["w1"].shape[1]
    TQ = min(q_tile, S)
    assert S % TQ == 0, "sequence length must be divisible by the query tile"
    NQ = S // TQ

    f32, bf16 = jnp.float32, jnp.bfloat16

    # layout plumbing in the wrapper: split fused QKV, cast big mats to bf16
    w_qkv = params["w_qkv"]
    b_qkv = params["b_qkv"].astype(f32)
    w_q, w_k, w_v = (w_qkv[:, 0:D].astype(bf16),
                     w_qkv[:, D:2 * D].astype(bf16),
                     w_qkv[:, 2 * D:3 * D].astype(bf16))
    b_q, b_k, b_v = b_qkv[:, 0:D], b_qkv[:, D:2 * D], b_qkv[:, 2 * D:3 * D]
    w_o, b_o = params["w_o"].astype(bf16), params["b_o"].astype(f32)
    w1, b1 = params["w1"].astype(bf16), params["b1"].astype(f32)
    w2, b2 = params["w2"].astype(bf16), params["b2"].astype(f32)
    g1, be1 = params["g1"].astype(f32), params["be1"].astype(f32)
    g2, be2 = params["g2"].astype(f32), params["be2"].astype(f32)

    kernel = functools.partial(_block_kernel, S, D, num_heads, TQ)

    const2d = lambda b, q, f: (0, 0)
    in_specs = [
        pl.BlockSpec((1, S, D), lambda b, q, f: (b, 0, 0)),  # x (full seq for K/V)
        pl.BlockSpec((D, D), const2d),                       # w_q
        pl.BlockSpec((1, D), const2d),                       # b_q
        pl.BlockSpec((D, D), const2d),                       # w_k
        pl.BlockSpec((1, D), const2d),                       # b_k
        pl.BlockSpec((D, D), const2d),                       # w_v
        pl.BlockSpec((1, D), const2d),                       # b_v
        pl.BlockSpec((D, D), const2d),                       # w_o
        pl.BlockSpec((1, D), const2d),                       # b_o
        pl.BlockSpec((1, D), const2d),                       # ln1 gamma
        pl.BlockSpec((1, D), const2d),                       # ln1 beta
        pl.BlockSpec((1, D), const2d),                       # ln2 gamma
        pl.BlockSpec((1, D), const2d),                       # ln2 beta
        pl.BlockSpec((D, H), const2d),                       # mlp w1
        pl.BlockSpec((1, H), const2d),                       # mlp b1
        pl.BlockSpec((H, D), const2d),                       # mlp w2
        pl.BlockSpec((1, D), const2d),                       # mlp b2
    ]
    out_spec = pl.BlockSpec((1, TQ, D), lambda b, q, f: (b, q, 0))

    return pl.pallas_call(
        kernel,
        out_shape=jax.ShapeDtypeStruct((B, S, D), x.dtype),
        grid_spec=pltpu.PrefetchScalarGridSpec(
            num_scalar_prefetch=1,
            grid=(B, NQ),
            in_specs=in_specs,
            out_specs=out_spec,
            scratch_shapes=[pltpu.VMEM((TQ, D), jnp.float32)],  # h_mid (residual) in f32
        ),
        compiler_params=pltpu.CompilerParams(
            dimension_semantics=("parallel", "parallel"),
            vmem_limit_bytes=48 * 1024 * 1024,   # explicit, with headroom under v7x 64 MiB
        ),
    )(skip_flags, x,
      w_q, b_q, w_k, b_k, w_v, b_v, w_o, b_o,
      g1, be1, g2, be2, w1, b1, w2, b2)


# ------------- skip-layer decision (AssistantEvents.compute_skip_layers) ------
def compute_skip_flags(scores, cfg: AssistanceConfig, layer_idx: int):
    # mirrors: scores = model(h).squeeze().abs(); then topk-smallest / threshold
    s = jnp.abs(jnp.squeeze(scores))
    n = s.shape[0]
    if cfg.prune_nlayers is not None:
        _, idx = lax.top_k(-s, cfg.prune_nlayers)               # k smallest
        skip_mask = jnp.zeros((n,), bool).at[idx].set(True)
    else:
        skip_mask = s < cfg.prune_ndist
        if cfg.prune_maxlayers is not None:
            masked = jnp.where(skip_mask, s, jnp.inf)
            _, idx = lax.top_k(-masked, cfg.prune_maxlayers)
            limited = jnp.zeros((n,), bool).at[idx].set(True) & skip_mask
            skip_mask = jnp.where(jnp.sum(skip_mask) > cfg.prune_maxlayers,
                                  limited, skip_mask)
    a_idx, m_idx = 2 * layer_idx, 2 * layer_idx + 1
    return jnp.stack([skip_mask[a_idx], skip_mask[m_idx]]).astype(jnp.int32)


# ----------------------------- pure-JAX reference ------------------------------
def ref_forward(x, params, flags, num_heads):
    keep_attn = 1.0 - flags[0].astype(jnp.float32)
    keep_mlp = 1.0 - flags[1].astype(jnp.float32)
    B, S, D = x.shape
    HD = D // num_heads

    h1 = _layernorm(x, params["g1"], params["be1"])
    qkv = h1 @ params["w_qkv"] + params["b_qkv"]
    q, k, v = jnp.split(qkv, 3, axis=-1)
    split = lambda t: t.reshape(B, S, num_heads, HD).transpose(0, 2, 1, 3)
    qh, kh, vh = split(q), split(k), split(v)
    s = jnp.einsum("bhqd,bhkd->bhqk", qh, kh) * (1.0 / (HD ** 0.5))
    mask = jnp.tril(jnp.ones((S, S), bool))
    s = jnp.where(mask, s, -1e30)
    p = jax.nn.softmax(s, axis=-1)
    a = jnp.einsum("bhqk,bhkd->bhqd", p, vh).transpose(0, 2, 1, 3).reshape(B, S, D)
    attn_out = a @ params["w_o"] + params["b_o"]
    h = x + attn_out * keep_attn

    h2 = _layernorm(h, params["g2"], params["be2"])
    m = _gelu_tanh(h2 @ params["w1"] + params["b1"])
    m = m @ params["w2"] + params["b2"]
    return h + m * keep_mlp


# ----------------------------- main -------------------------------------------
if __name__ == "__main__":
    B, S, D, NH = 2, 8, 32, 4      # toy shapes; production shapes should keep S, D, HD
    H = 4 * D                      # multiples of 8 / 128 for lane-dense stores & full MXU
    NUM_LAYERS = 2                 # two notional transformer layers -> 4 sublayer scores
    LAYER_IDX = 0                  # we implement layer 0 of the stack

    key = jax.random.PRNGKey(0)
    ks = jax.random.split(key, 8)

    params = {
        "w_qkv": 0.02 * jax.random.normal(ks[0], (D, 3 * D), jnp.float32),
        "b_qkv": jnp.zeros((1, 3 * D), jnp.float32),
        "w_o":   0.02 * jax.random.normal(ks[1], (D, D), jnp.float32),
        "b_o":   jnp.zeros((1, D), jnp.float32),
        "g1":    jnp.ones((1, D), jnp.float32),
        "be1":   jnp.zeros((1, D), jnp.float32),
        "g2":    jnp.ones((1, D), jnp.float32),
        "be2":   jnp.zeros((1, D), jnp.float32),
        "w1":    0.02 * jax.random.normal(ks[2], (D, H), jnp.float32),
        "b1":    jnp.zeros((1, H), jnp.float32),
        "w2":    0.02 * jax.random.normal(ks[3], (H, D), jnp.float32),
        "b2":    jnp.zeros((1, D), jnp.float32),
    }

    x = jax.random.normal(ks[4], (B, S, D), jnp.float32)
    scores = jax.random.normal(ks[5], (2 * NUM_LAYERS,), jnp.float32)  # assistant scores

    cfg = AssistanceConfig(prune_nlayers=2)
    assistant_flags = compute_skip_flags(scores, cfg, LAYER_IDX)  # [skip_attn, skip_mlp]

    test_flags = [
        assistant_flags,
        jnp.array([0, 0], jnp.int32),   # keep both sublayers
        jnp.array([1, 0], jnp.int32),   # nullify attention only
        jnp.array([0, 1], jnp.int32),   # nullify MLP only
        jnp.array([1, 1], jnp.int32),   # nullify both
    ]

    for flags in test_flags:
        out = jax.block_until_ready(skippable_block_forward(x, params, flags, NH))
        ref = ref_forward(x, params, flags, NH)
        # bf16 matmul inputs + approx reciprocal in the kernel vs an f32 reference
        if not jnp.allclose(out, ref, rtol=2e-2, atol=2e-2):
            raise AssertionError(
                f"Pallas kernel does not match pure-JAX reference for flags={flags}")

    print("KERNEL_OK")
</pallas_src>

<mosaic_0001>
module attributes {stable_mosaic.version = 11 : i64} {
  func.func @_block_kernel(%arg0: i32, %arg1: i32, %arg2: memref<2xi32, #tpu.memory_space<smem>>, %arg3: memref<1x8x32xf32, #tpu.memory_space<vmem>>, %arg4: memref<32x32xbf16, #tpu.memory_space<vmem>>, %arg5: memref<1x32xf32, #tpu.memory_space<vmem>>, %arg6: memref<32x32xbf16, #tpu.memory_space<vmem>>, %arg7: memref<1x32xf32, #tpu.memory_space<vmem>>, %arg8: memref<32x32xbf16, #tpu.memory_space<vmem>>, %arg9: memref<1x32xf32, #tpu.memory_space<vmem>>, %arg10: memref<32x32xbf16, #tpu.memory_space<vmem>>, %arg11: memref<1x32xf32, #tpu.memory_space<vmem>>, %arg12: memref<1x32xf32, #tpu.memory_space<vmem>>, %arg13: memref<1x32xf32, #tpu.memory_space<vmem>>, %arg14: memref<1x32xf32, #tpu.memory_space<vmem>>, %arg15: memref<1x32xf32, #tpu.memory_space<vmem>>, %arg16: memref<32x128xbf16, #tpu.memory_space<vmem>>, %arg17: memref<1x128xf32, #tpu.memory_space<vmem>>, %arg18: memref<128x32xbf16, #tpu.memory_space<vmem>>, %arg19: memref<1x32xf32, #tpu.memory_space<vmem>>, %arg20: memref<1x8x32xf32, #tpu.memory_space<vmem>>, %arg21: memref<8x32xf32, #tpu.memory_space<vmem>>) attributes {dimension_semantics = [#tpu.dimension_semantics<parallel>, #tpu.dimension_semantics<parallel>], iteration_bounds = array<i64: 2, 1>, scalar_prefetch = 1 : i64, scratch_operands = 1 : i64, tpu.core_type = #tpu.core_type<tc>, window_params = [{transform_indices = @transform_0, window_bounds = array<i64: 1, 8, 32>}, {pipeline_mode = #tpu.pipeline_mode<synchronous>, transform_indices = @transform_1, window_bounds = array<i64: 32, 32>}, {pipeline_mode = #tpu.pipeline_mode<synchronous>, transform_indices = @transform_2, window_bounds = array<i64: 1, 32>}, {pipeline_mode = #tpu.pipeline_mode<synchronous>, transform_indices = @transform_3, window_bounds = array<i64: 32, 32>}, {pipeline_mode = #tpu.pipeline_mode<synchronous>, transform_indices = @transform_4, window_bounds = array<i64: 1, 32>}, {pipeline_mode = #tpu.pipeline_mode<synchronous>, transform_indices = @transform_5, window_bounds = array<i64: 32, 32>}, {pipeline_mode = #tpu.pipeline_mode<synchronous>, transform_indices = @transform_6, window_bounds = array<i64: 1, 32>}, {pipeline_mode = #tpu.pipeline_mode<synchronous>, transform_indices = @transform_7, window_bounds = array<i64: 32, 32>}, {pipeline_mode = #tpu.pipeline_mode<synchronous>, transform_indices = @transform_8, window_bounds = array<i64: 1, 32>}, {pipeline_mode = #tpu.pipeline_mode<synchronous>, transform_indices = @transform_9, window_bounds = array<i64: 1, 32>}, {pipeline_mode = #tpu.pipeline_mode<synchronous>, transform_indices = @transform_10, window_bounds = array<i64: 1, 32>}, {pipeline_mode = #tpu.pipeline_mode<synchronous>, transform_indices = @transform_11, window_bounds = array<i64: 1, 32>}, {pipeline_mode = #tpu.pipeline_mode<synchronous>, transform_indices = @transform_12, window_bounds = array<i64: 1, 32>}, {pipeline_mode = #tpu.pipeline_mode<synchronous>, transform_indices = @transform_13, window_bounds = array<i64: 32, 128>}, {pipeline_mode = #tpu.pipeline_mode<synchronous>, transform_indices = @transform_14, window_bounds = array<i64: 1, 128>}, {pipeline_mode = #tpu.pipeline_mode<synchronous>, transform_indices = @transform_15, window_bounds = array<i64: 128, 32>}, {pipeline_mode = #tpu.pipeline_mode<synchronous>, transform_indices = @transform_16, window_bounds = array<i64: 1, 32>}, {transform_indices = @transform_17, window_bounds = array<i64: 1, 8, 32>}]} {
    %c8_i32 = arith.constant 8 : i32
    %0 = arith.muli %arg1, %c8_i32 : i32
    %1 = tpu.assume_multiple %0, 8 : i32
    %c0 = arith.constant 0 : index
    %2 = memref.load %arg2[%c0] : memref<2xi32, #tpu.memory_space<smem>>
    %c1 = arith.constant 1 : index
    %3 = memref.load %arg2[%c1] : memref<2xi32, #tpu.memory_space<smem>>
    %c0_i32 = arith.constant 0 : i32
    %4 = arith.cmpi eq, %2, %c0_i32 : i32
    %5 = arith.extui %4 : i1 to i32
    %c0_i32_0 = arith.constant 0 : i32
    %6 = arith.cmpi ne, %5, %c0_i32_0 : i32
    scf.if %6 {
      %c0_7 = arith.constant 0 : index
      %c0_8 = arith.constant 0 : index
      %c0_9 = arith.constant 0 : index
      %16 = vector.load %arg3[%c0_7, %c0_8, %c0_9] : memref<1x8x32xf32, #tpu.memory_space<vmem>>, vector<1x8x32xf32>
      %17 = vector.shape_cast %16 : vector<1x8x32xf32> to vector<8x32xf32>
      %c0_10 = arith.constant 0 : index
      %18 = arith.index_cast %1 : i32 to index
      %c0_11 = arith.constant 0 : index
      %19 = vector.load %arg3[%c0_10, %18, %c0_11] : memref<1x8x32xf32, #tpu.memory_space<vmem>>, vector<1x8x32xf32>
      %20 = vector.shape_cast %19 : vector<1x8x32xf32> to vector<8x32xf32>
      %c0_12 = arith.constant 0 : index
      %c0_13 = arith.constant 0 : index
      %21 = vector.load %arg12[%c0_12, %c0_13] : memref<1x32xf32, #tpu.memory_space<vmem>>, vector<1x32xf32>
      %c0_14 = arith.constant 0 : index
      %c0_15 = arith.constant 0 : index
      %22 = vector.load %arg13[%c0_14, %c0_15] : memref<1x32xf32, #tpu.memory_space<vmem>>, vector<1x32xf32>
      %cst = arith.constant dense<0.000000e+00> : vector<8xf32>
      %23 = vector.multi_reduction <add>, %17, %cst [1] : vector<8x32xf32> to vector<8xf32>
      %24 = vector.shape_cast %23 : vector<8xf32> to vector<8x1xf32>
      %cst_16 = arith.constant 3.200000e+01 : f32
      %25 = vector.broadcast %cst_16 : f32 to vector<8x1xf32>
      %26 = arith.divf %24, %25 : vector<8x1xf32>
      %27 = vector.broadcast %26 : vector<8x1xf32> to vector<8x32xf32>
      %28 = arith.subf %17, %27 : vector<8x32xf32>
      %29 = arith.mulf %28, %28 : vector<8x32xf32>
      %cst_17 = arith.constant dense<0.000000e+00> : vector<8xf32>
      %30 = vector.multi_reduction <add>, %29, %cst_17 [1] : vector<8x32xf32> to vector<8xf32>
      %31 = vector.shape_cast %30 : vector<8xf32> to vector<8x1xf32>
      %cst_18 = arith.constant 3.200000e+01 : f32
      %32 = vector.broadcast %cst_18 : f32 to vector<8x1xf32>
      %33 = arith.divf %31, %32 : vector<8x1xf32>
      %34 = vector.broadcast %26 : vector<8x1xf32> to vector<8x32xf32>
      %35 = arith.subf %17, %34 : vector<8x32xf32>
      %cst_19 = arith.constant 9.99999974E-6 : f32
      %36 = vector.broadcast %cst_19 : f32 to vector<8x1xf32>
      %37 = arith.addf %33, %36 : vector<8x1xf32>
      %38 = math.rsqrt %37 : vector<8x1xf32>
      %39 = vector.broadcast %38 : vector<8x1xf32> to vector<8x32xf32>
      %40 = arith.mulf %35, %39 : vector<8x32xf32>
      %41 = vector.broadcast %21 : vector<1x32xf32> to vector<8x32xf32>
      %42 = arith.mulf %40, %41 : vector<8x32xf32>
      %43 = vector.broadcast %22 : vector<1x32xf32> to vector<8x32xf32>
      %44 = arith.addf %42, %43 : vector<8x32xf32>
      %c0_20 = arith.constant 0 : index
      %c0_21 = arith.constant 0 : index
      %45 = vector.load %arg12[%c0_20, %c0_21] : memref<1x32xf32, #tpu.memory_space<vmem>>, vector<1x32xf32>
      %c0_22 = arith.constant 0 : index
      %c0_23 = arith.constant 0 : index
      %46 = vector.load %arg13[%c0_22, %c0_23] : memref<1x32xf32, #tpu.memory_space<vmem>>, vector<1x32xf32>
      %cst_24 = arith.constant dense<0.000000e+00> : vector<8xf32>
      %47 = vector.multi_reduction <add>, %20, %cst_24 [1] : vector<8x32xf32> to vector<8xf32>
      %48 = vector.shape_cast %47 : vector<8xf32> to vector<8x1xf32>
      %cst_25 = arith.constant 3.200000e+01 : f32
      %49 = vector.broadcast %cst_25 : f32 to vector<8x1xf32>
      %50 = arith.divf %48, %49 : vector<8x1xf32>
      %51 = vector.broadcast %50 : vector<8x1xf32> to vector<8x32xf32>
      %52 = arith.subf %20, %51 : vector<8x32xf32>
      %53 = arith.mulf %52, %52 : vector<8x32xf32>
      %cst_26 = arith.constant dense<0.000000e+00> : vector<8xf32>
      %54 = vector.multi_reduction <add>, %53, %cst_26 [1] : vector<8x32xf32> to vector<8xf32>
      %55 = vector.shape_cast %54 : vector<8xf32> to vector<8x1xf32>
      %cst_27 = arith.constant 3.200000e+01 : f32
      %56 = vector.broadcast %cst_27 : f32 to vector<8x1xf32>
      %57 = arith.divf %55, %56 : vector<8x1xf32>
      %58 = vector.broadcast %50 : vector<8x1xf32> to vector<8x32xf32>
      %59 = arith.subf %20, %58 : vector<8x32xf32>
      %cst_28 = arith.constant 9.99999974E-6 : f32
      %60 = vector.broadcast %cst_28 : f32 to vector<8x1xf32>
      %61 = arith.addf %57, %60 : vector<8x1xf32>
      %62 = math.rsqrt %61 : vector<8x1xf32>
      %63 = vector.broadcast %62 : vector<8x1xf32> to vector<8x32xf32>
      %64 = arith.mulf %59, %63 : vector<8x32xf32>
      %65 = vector.broadcast %45 : vector<1x32xf32> to vector<8x32xf32>
      %66 = arith.mulf %64, %65 : vector<8x32xf32>
      %67 = vector.broadcast %46 : vector<1x32xf32> to vector<8x32xf32>
      %68 = arith.addf %66, %67 : vector<8x32xf32>
      %69 = arith.truncf %44 : vector<8x32xf32> to vector<8x32xbf16>
      %70 = arith.truncf %68 : vector<8x32xf32> to vector<8x32xbf16>
      %c0_29 = arith.constant 0 : index
      %c0_30 = arith.constant 0 : index
      %71 = vector.load %arg4[%c0_29, %c0_30] : memref<32x32xbf16, #tpu.memory_space<vmem>>, vector<32x32xbf16>
      %cst_31 = arith.constant dense<0.000000e+00> : vector<8x32xf32>
      %72 = tpu.matmul %70, %71, %cst_31 {dimension_numbers = #tpu.dot_dimension_numbers<[1], [0], [0], [1], [0, 0, 1, 1], [], []>} : vector<8x32xbf16>, vector<32x32xbf16>, vector<8x32xf32> -> vector<8x32xf32>
      %c0_32 = arith.constant 0 : index
      %c0_33 = arith.constant 0 : index
      %73 = vector.load %arg5[%c0_32, %c0_33] : memref<1x32xf32, #tpu.memory_space<vmem>>, vector<1x32xf32>
      %74 = vector.broadcast %73 : vector<1x32xf32> to vector<8x32xf32>
      %75 = arith.addf %72, %74 : vector<8x32xf32>
      %c0_34 = arith.constant 0 : index
      %c0_35 = arith.constant 0 : index
      %76 = vector.load %arg6[%c0_34, %c0_35] : memref<32x32xbf16, #tpu.memory_space<vmem>>, vector<32x32xbf16>
      %cst_36 = arith.constant dense<0.000000e+00> : vector<8x32xf32>
      %77 = tpu.matmul %69, %76, %cst_36 {dimension_numbers = #tpu.dot_dimension_numbers<[1], [0], [0], [1], [0, 0, 1, 1], [], []>} : vector<8x32xbf16>, vector<32x32xbf16>, vector<8x32xf32> -> vector<8x32xf32>
      %c0_37 = arith.constant 0 : index
      %c0_38 = arith.constant 0 : index
      %78 = vector.load %arg7[%c0_37, %c0_38] : memref<1x32xf32, #tpu.memory_space<vmem>>, vector<1x32xf32>
      %79 = vector.broadcast %78 : vector<1x32xf32> to vector<8x32xf32>
      %80 = arith.addf %77, %79 : vector<8x32xf32>
      %c0_39 = arith.constant 0 : index
      %c0_40 = arith.constant 0 : index
      %81 = vector.load %arg8[%c0_39, %c0_40] : memref<32x32xbf16, #tpu.memory_space<vmem>>, vector<32x32xbf16>
      %cst_41 = arith.constant dense<0.000000e+00> : vector<8x32xf32>
      %82 = tpu.matmul %69, %81, %cst_41 {dimension_numbers = #tpu.dot_dimension_numbers<[1], [0], [0], [1], [0, 0, 1, 1], [], []>} : vector<8x32xbf16>, vector<32x32xbf16>, vector<8x32xf32> -> vector<8x32xf32>
      %c0_42 = arith.constant 0 : index
      %c0_43 = arith.constant 0 : index
      %83 = vector.load %arg9[%c0_42, %c0_43] : memref<1x32xf32, #tpu.memory_space<vmem>>, vector<1x32xf32>
      %84 = vector.broadcast %83 : vector<1x32xf32> to vector<8x32xf32>
      %85 = arith.addf %82, %84 : vector<8x32xf32>
      %86 = vector.extract_strided_slice %75 {offsets = [0, 0], sizes = [8, 8], strides = [1, 1]} : vector<8x32xf32> to vector<8x8xf32>
      %87 = vector.extract_strided_slice %75 {offsets = [0, 8], sizes = [8, 8], strides = [1, 1]} : vector<8x32xf32> to vector<8x8xf32>
      %88 = vector.extract_strided_slice %75 {offsets = [0, 16], sizes = [8, 8], strides = [1, 1]} : vector<8x32xf32> to vector<8x8xf32>
      %89 = vector.extract_strided_slice %75 {offsets = [0, 24], sizes = [8, 8], strides = [1, 1]} : vector<8x32xf32> to vector<8x8xf32>
      %90 = vector.shape_cast %86 : vector<8x8xf32> to vector<1x8x8xf32>
      %91 = vector.shape_cast %87 : vector<8x8xf32> to vector<1x8x8xf32>
      %92 = vector.shape_cast %88 : vector<8x8xf32> to vector<1x8x8xf32>
      %93 = vector.shape_cast %89 : vector<8x8xf32> to vector<1x8x8xf32>
      %94 = tpu.concatenate %90, %91, %92, %93 in 0 : vector<1x8x8xf32>, vector<1x8x8xf32>, vector<1x8x8xf32>, vector<1x8x8xf32> -> vector<4x8x8xf32>
      %95 = arith.truncf %94 : vector<4x8x8xf32> to vector<4x8x8xbf16>
      %96 = vector.extract_strided_slice %80 {offsets = [0, 0], sizes = [8, 8], strides = [1, 1]} : vector<8x32xf32> to vector<8x8xf32>
      %97 = vector.extract_strided_slice %80 {offsets = [0, 8], sizes = [8, 8], strides = [1, 1]} : vector<8x32xf32> to vector<8x8xf32>
      %98 = vector.extract_strided_slice %80 {offsets = [0, 16], sizes = [8, 8], strides = [1, 1]} : vector<8x32xf32> to vector<8x8xf32>
      %99 = vector.extract_strided_slice %80 {offsets = [0, 24], sizes = [8, 8], strides = [1, 1]} : vector<8x32xf32> to vector<8x8xf32>
      %100 = vector.shape_cast %96 : vector<8x8xf32> to vector<1x8x8xf32>
      %101 = vector.shape_cast %97 : vector<8x8xf32> to vector<1x8x8xf32>
      %102 = vector.shape_cast %98 : vector<8x8xf32> to vector<1x8x8xf32>
      %103 = vector.shape_cast %99 : vector<8x8xf32> to vector<1x8x8xf32>
      %104 = tpu.concatenate %100, %101, %102, %103 in 0 : vector<1x8x8xf32>, vector<1x8x8xf32>, vector<1x8x8xf32>, vector<1x8x8xf32> -> vector<4x8x8xf32>
      %105 = arith.truncf %104 : vector<4x8x8xf32> to vector<4x8x8xbf16>
      %106 = vector.extract_strided_slice %85 {offsets = [0, 0], sizes = [8, 8], strides = [1, 1]} : vector<8x32xf32> to vector<8x8xf32>
      %107 = vector.extract_strided_slice %85 {offsets = [0, 8], sizes = [8, 8], strides = [1, 1]} : vector<8x32xf32> to vector<8x8xf32>
      %108 = vector.extract_strided_slice %85 {offsets = [0, 16], sizes = [8, 8], strides = [1, 1]} : vector<8x32xf32> to vector<8x8xf32>
      %109 = vector.extract_strided_slice %85 {offsets = [0, 24], sizes = [8, 8], strides = [1, 1]} : vector<8x32xf32> to vector<8x8xf32>
      %110 = vector.shape_cast %106 : vector<8x8xf32> to vector<1x8x8xf32>
      %111 = vector.shape_cast %107 : vector<8x8xf32> to vector<1x8x8xf32>
      %112 = vector.shape_cast %108 : vector<8x8xf32> to vector<1x8x8xf32>
      %113 = vector.shape_cast %109 : vector<8x8xf32> to vector<1x8x8xf32>
      %114 = tpu.concatenate %110, %111, %112, %113 in 0 : vector<1x8x8xf32>, vector<1x8x8xf32>, vector<1x8x8xf32>, vector<1x8x8xf32> -> vector<4x8x8xf32>
      %115 = arith.truncf %114 : vector<4x8x8xf32> to vector<4x8x8xbf16>
      "tpu.trace_start"() <{level = 10 : i32, message = "hqd,hkd->hqk"}> : () -> ()
      %cst_44 = arith.constant dense<0.000000e+00> : vector<4x8x8xf32>
      %116 = tpu.matmul %95, %105, %cst_44 {dimension_numbers = #tpu.dot_dimension_numbers<[2], [2], [1], [1], [0, 0, 0, 1, 1, 1], [0], [0]>} : vector<4x8x8xbf16>, vector<4x8x8xbf16>, vector<4x8x8xf32> -> vector<4x8x8xf32>
      "tpu.trace_stop"() : () -> ()
      %cst_45 = arith.constant 0.353553385 : f32
      %117 = vector.broadcast %cst_45 : f32 to vector<4x8x8xf32>
      %118 = arith.mulf %116, %117 : vector<4x8x8xf32>
      %119 = tpu.iota {dimensions = array<i32: 0>} : vector<8x8xi32>
      %120 = vector.broadcast %1 : i32 to vector<8x8xi32>
      %121 = arith.addi %120, %119 : vector<8x8xi32>
      %122 = tpu.iota {dimensions = array<i32: 1>} : vector<8x8xi32>
      %123 = arith.cmpi sge, %121, %122 : vector<8x8xi32>
      %cst_46 = arith.constant -1.000000e+30 : f32
      %124 = vector.shape_cast %123 : vector<8x8xi1> to vector<1x8x8xi1>
      %125 = vector.broadcast %124 : vector<1x8x8xi1> to vector<4x8x8xi1>
      %126 = vector.broadcast %cst_46 : f32 to vector<4x8x8xf32>
      %127 = arith.select %125, %118, %126 : vector<4x8x8xi1>, vector<4x8x8xf32>
      %cst_47 = arith.constant dense<0xFF800000> : vector<4x8xf32>
      %128 = vector.multi_reduction <maximumf>, %127, %cst_47 [2] : vector<4x8x8xf32> to vector<4x8xf32>
      %129 = vector.shape_cast %128 : vector<4x8xf32> to vector<4x8x1xf32>
      %130 = vector.broadcast %129 : vector<4x8x1xf32> to vector<4x8x8xf32>
      %131 = arith.subf %127, %130 : vector<4x8x8xf32>
      %132 = math.exp %131 : vector<4x8x8xf32>
      %cst_48 = arith.constant dense<0.000000e+00> : vector<4x8xf32>
      %133 = vector.multi_reduction <add>, %132, %cst_48 [2] : vector<4x8x8xf32> to vector<4x8xf32>
      %134 = vector.shape_cast %133 : vector<4x8xf32> to vector<4x8x1xf32>
      %135 = tpu.reciprocal %134 {approx = true} : vector<4x8x1xf32> -> vector<4x8x1xf32>
      %136 = vector.broadcast %135 : vector<4x8x1xf32> to vector<4x8x8xf32>
      %137 = arith.mulf %132, %136 : vector<4x8x8xf32>
      %138 = arith.truncf %137 : vector<4x8x8xf32> to vector<4x8x8xbf16>
      "tpu.trace_start"() <{level = 10 : i32, message = "hqk,hkd->hqd"}> : () -> ()
      %cst_49 = arith.constant dense<0.000000e+00> : vector<4x8x8xf32>
      %139 = tpu.matmul %138, %115, %cst_49 {dimension_numbers = #tpu.dot_dimension_numbers<[2], [1], [1], [2], [0, 0, 0, 1, 1, 2], [0], [0]>} : vector<4x8x8xbf16>, vector<4x8x8xbf16>, vector<4x8x8xf32> -> vector<4x8x8xf32>
      "tpu.trace_stop"() : () -> ()
      %140 = vector.extract_strided_slice %139 {offsets = [0, 0, 0], sizes = [1, 8, 8], strides = [1, 1, 1]} : vector<4x8x8xf32> to vector<1x8x8xf32>
      %141 = vector.shape_cast %140 : vector<1x8x8xf32> to vector<8x8xf32>
      %142 = vector.extract_strided_slice %139 {offsets = [1, 0, 0], sizes = [1, 8, 8], strides = [1, 1, 1]} : vector<4x8x8xf32> to vector<1x8x8xf32>
      %143 = vector.shape_cast %142 : vector<1x8x8xf32> to vector<8x8xf32>
      %144 = vector.extract_strided_slice %139 {offsets = [2, 0, 0], sizes = [1, 8, 8], strides = [1, 1, 1]} : vector<4x8x8xf32> to vector<1x8x8xf32>
      %145 = vector.shape_cast %144 : vector<1x8x8xf32> to vector<8x8xf32>
      %146 = vector.extract_strided_slice %139 {offsets = [3, 0, 0], sizes = [1, 8, 8], strides = [1, 1, 1]} : vector<4x8x8xf32> to vector<1x8x8xf32>
      %147 = vector.shape_cast %146 : vector<1x8x8xf32> to vector<8x8xf32>
      %148 = tpu.concatenate %141, %143, %145, %147 in 1 : vector<8x8xf32>, vector<8x8xf32>, vector<8x8xf32>, vector<8x8xf32> -> vector<8x32xf32>
      %149 = arith.truncf %148 : vector<8x32xf32> to vector<8x32xbf16>
      %c0_50 = arith.constant 0 : index
      %c0_51 = arith.constant 0 : index
      %150 = vector.load %arg10[%c0_50, %c0_51] : memref<32x32xbf16, #tpu.memory_space<vmem>>, vector<32x32xbf16>
      %cst_52 = arith.constant dense<0.000000e+00> : vector<8x32xf32>
      %151 = tpu.matmul %149, %150, %cst_52 {dimension_numbers = #tpu.dot_dimension_numbers<[1], [0], [0], [1], [0, 0, 1, 1], [], []>} : vector<8x32xbf16>, vector<32x32xbf16>, vector<8x32xf32> -> vector<8x32xf32>
      %c0_53 = arith.constant 0 : index
      %c0_54 = arith.constant 0 : index
      %152 = vector.load %arg11[%c0_53, %c0_54] : memref<1x32xf32, #tpu.memory_space<vmem>>, vector<1x32xf32>
      %153 = vector.broadcast %152 : vector<1x32xf32> to vector<8x32xf32>
      %154 = arith.addf %151, %153 : vector<8x32xf32>
      %155 = arith.addf %20, %154 : vector<8x32xf32>
      %c0_55 = arith.constant 0 : index
      %c0_56 = arith.constant 0 : index
      %156 = vector.load %arg21[%c0_55, %c0_56] : memref<8x32xf32, #tpu.memory_space<vmem>>, vector<8x32xf32>
      tpu.vector_store %arg21[%c0_55, %c0_56], %155 {strides = array<i32>} : memref<8x32xf32, #tpu.memory_space<vmem>>, vector<8x32xf32>,
    } else {
    }
    %c0_i32_1 = arith.constant 0 : i32
    %7 = arith.cmpi ne, %2, %c0_i32_1 : i32
    %8 = arith.extui %7 : i1 to i32
    %c0_i32_2 = arith.constant 0 : i32
    %9 = arith.cmpi ne, %8, %c0_i32_2 : i32
    scf.if %9 {
      %c0_7 = arith.constant 0 : index
      %16 = arith.index_cast %1 : i32 to index
      %c0_8 = arith.constant 0 : index
      %17 = vector.load %arg3[%c0_7, %16, %c0_8] : memref<1x8x32xf32, #tpu.memory_space<vmem>>, vector<1x8x32xf32>
      %18 = vector.shape_cast %17 : vector<1x8x32xf32> to vector<8x32xf32>
      %c0_9 = arith.constant 0 : index
      %c0_10 = arith.constant 0 : index
      %19 = vector.load %arg21[%c0_9, %c0_10] : memref<8x32xf32, #tpu.memory_space<vmem>>, vector<8x32xf32>
      tpu.vector_store %arg21[%c0_9, %c0_10], %18 {strides = array<i32>} : memref<8x32xf32, #tpu.memory_space<vmem>>, vector<8x32xf32>,
    } else {
    }
    %c0_i32_3 = arith.constant 0 : i32
    %10 = arith.cmpi eq, %3, %c0_i32_3 : i32
    %11 = arith.extui %10 : i1 to i32
    %c0_i32_4 = arith.constant 0 : i32
    %12 = arith.cmpi ne, %11, %c0_i32_4 : i32
    scf.if %12 {
      %c0_7 = arith.constant 0 : index
      %c0_8 = arith.constant 0 : index
      %16 = vector.load %arg21[%c0_7, %c0_8] : memref<8x32xf32, #tpu.memory_space<vmem>>, vector<8x32xf32>
      %c0_9 = arith.constant 0 : index
      %c0_10 = arith.constant 0 : index
      %17 = vector.load %arg14[%c0_9, %c0_10] : memref<1x32xf32, #tpu.memory_space<vmem>>, vector<1x32xf32>
      %c0_11 = arith.constant 0 : index
      %c0_12 = arith.constant 0 : index
      %18 = vector.load %arg15[%c0_11, %c0_12] : memref<1x32xf32, #tpu.memory_space<vmem>>, vector<1x32xf32>
      %cst = arith.constant dense<0.000000e+00> : vector<8xf32>
      %19 = vector.multi_reduction <add>, %16, %cst [1] : vector<8x32xf32> to vector<8xf32>
      %20 = vector.shape_cast %19 : vector<8xf32> to vector<8x1xf32>
      %cst_13 = arith.constant 3.200000e+01 : f32
      %21 = vector.broadcast %cst_13 : f32 to vector<8x1xf32>
      %22 = arith.divf %20, %21 : vector<8x1xf32>
      %23 = vector.broadcast %22 : vector<8x1xf32> to vector<8x32xf32>
      %24 = arith.subf %16, %23 : vector<8x32xf32>
      %25 = arith.mulf %24, %24 : vector<8x32xf32>
      %cst_14 = arith.constant dense<0.000000e+00> : vector<8xf32>
      %26 = vector.multi_reduction <add>, %25, %cst_14 [1] : vector<8x32xf32> to vector<8xf32>
      %27 = vector.shape_cast %26 : vector<8xf32> to vector<8x1xf32>
      %cst_15 = arith.constant 3.200000e+01 : f32
      %28 = vector.broadcast %cst_15 : f32 to vector<8x1xf32>
      %29 = arith.divf %27, %28 : vector<8x1xf32>
      %30 = vector.broadcast %22 : vector<8x1xf32> to vector<8x32xf32>
      %31 = arith.subf %16, %30 : vector<8x32xf32>
      %cst_16 = arith.constant 9.99999974E-6 : f32
      %32 = vector.broadcast %cst_16 : f32 to vector<8x1xf32>
      %33 = arith.addf %29, %32 : vector<8x1xf32>
      %34 = math.rsqrt %33 : vector<8x1xf32>
      %35 = vector.broadcast %34 : vector<8x1xf32> to vector<8x32xf32>
      %36 = arith.mulf %31, %35 : vector<8x32xf32>
      %37 = vector.broadcast %17 : vector<1x32xf32> to vector<8x32xf32>
      %38 = arith.mulf %36, %37 : vector<8x32xf32>
      %39 = vector.broadcast %18 : vector<1x32xf32> to vector<8x32xf32>
      %40 = arith.addf %38, %39 : vector<8x32xf32>
      %41 = arith.truncf %40 : vector<8x32xf32> to vector<8x32xbf16>
      %c0_17 = arith.constant 0 : index
      %c0_18 = arith.constant 0 : index
      %42 = vector.load %arg16[%c0_17, %c0_18] : memref<32x128xbf16, #tpu.memory_space<vmem>>, vector<32x128xbf16>
      %cst_19 = arith.constant dense<0.000000e+00> : vector<8x128xf32>
      %43 = tpu.matmul %41, %42, %cst_19 {dimension_numbers = #tpu.dot_dimension_numbers<[1], [0], [0], [1], [0, 0, 1, 1], [], []>} : vector<8x32xbf16>, vector<32x128xbf16>, vector<8x128xf32> -> vector<8x128xf32>
      %c0_20 = arith.constant 0 : index
      %c0_21 = arith.constant 0 : index
      %44 = vector.load %arg17[%c0_20, %c0_21] : memref<1x128xf32, #tpu.memory_space<vmem>>, vector<1x128xf32>
      %45 = vector.broadcast %44 : vector<1x128xf32> to vector<8x128xf32>
      %46 = arith.addf %43, %45 : vector<8x128xf32>
      %cst_22 = arith.constant 5.000000e-01 : f32
      %47 = vector.broadcast %cst_22 : f32 to vector<8x128xf32>
      %48 = arith.mulf %47, %46 : vector<8x128xf32>
      %cst_23 = arith.constant 4.471500e-02 : f32
      %49 = vector.broadcast %cst_23 : f32 to vector<8x128xf32>
      %50 = arith.mulf %49, %46 : vector<8x128xf32>
      %51 = arith.mulf %50, %46 : vector<8x128xf32>
      %52 = arith.mulf %51, %46 : vector<8x128xf32>
      %53 = arith.addf %46, %52 : vector<8x128xf32>
      %cst_24 = arith.constant 0.797884583 : f32
      %54 = vector.broadcast %cst_24 : f32 to vector<8x128xf32>
      %55 = arith.mulf %54, %53 : vector<8x128xf32>
      %56 = math.tanh %55 : vector<8x128xf32>
      %cst_25 = arith.constant 1.000000e+00 : f32
      %57 = vector.broadcast %cst_25 : f32 to vector<8x128xf32>
      %58 = arith.addf %57, %56 : vector<8x128xf32>
      %59 = arith.mulf %48, %58 : vector<8x128xf32>
      %60 = arith.truncf %59 : vector<8x128xf32> to vector<8x128xbf16>
      %c0_26 = arith.constant 0 : index
      %c0_27 = arith.constant 0 : index
      %61 = vector.load %arg18[%c0_26, %c0_27] : memref<128x32xbf16, #tpu.memory_space<vmem>>, vector<128x32xbf16>
      %cst_28 = arith.constant dense<0.000000e+00> : vector<8x32xf32>
      %62 = tpu.matmul %60, %61, %cst_28 {dimension_numbers = #tpu.dot_dimension_numbers<[1], [0], [0], [1], [0, 0, 1, 1], [], []>} : vector<8x128xbf16>, vector<128x32xbf16>, vector<8x32xf32> -> vector<8x32xf32>
      %c0_29 = arith.constant 0 : index
      %c0_30 = arith.constant 0 : index
      %63 = vector.load %arg19[%c0_29, %c0_30] : memref<1x32xf32, #tpu.memory_space<vmem>>, vector<1x32xf32>
      %64 = vector.broadcast %63 : vector<1x32xf32> to vector<8x32xf32>
      %65 = arith.addf %62, %64 : vector<8x32xf32>
      %66 = arith.addf %16, %65 : vector<8x32xf32>
      %c0_31 = arith.constant 0 : index
      %c0_32 = arith.constant 0 : index
      %c0_33 = arith.constant 0 : index
      %67 = vector.load %arg20[%c0_31, %c0_32, %c0_33] : memref<1x8x32xf32, #tpu.memory_space<vmem>>, vector<1x8x32xf32>
      %68 = vector.shape_cast %67 : vector<1x8x32xf32> to vector<8x32xf32>
      %69 = vector.shape_cast %66 : vector<8x32xf32> to vector<1x8x32xf32>
      tpu.vector_store %arg20[%c0_31, %c0_32, %c0_33], %69 {strides = array<i32>} : memref<1x8x32xf32, #tpu.memory_space<vmem>>, vector<1x8x32xf32>,
    } else {
    }
    %c0_i32_5 = arith.constant 0 : i32
    %13 = arith.cmpi ne, %3, %c0_i32_5 : i32
    %14 = arith.extui %13 : i1 to i32
    %c0_i32_6 = arith.constant 0 : i32
    %15 = arith.cmpi ne, %14, %c0_i32_6 : i32
    scf.if %15 {
      %c0_7 = arith.constant 0 : index
      %c0_8 = arith.constant 0 : index
      %16 = vector.load %arg21[%c0_7, %c0_8] : memref<8x32xf32, #tpu.memory_space<vmem>>, vector<8x32xf32>
      %c0_9 = arith.constant 0 : index
      %c0_10 = arith.constant 0 : index
      %c0_11 = arith.constant 0 : index
      %17 = vector.load %arg20[%c0_9, %c0_10, %c0_11] : memref<1x8x32xf32, #tpu.memory_space<vmem>>, vector<1x8x32xf32>
      %18 = vector.shape_cast %17 : vector<1x8x32xf32> to vector<8x32xf32>
      %19 = vector.shape_cast %16 : vector<8x32xf32> to vector<1x8x32xf32>
      tpu.vector_store %arg20[%c0_9, %c0_10, %c0_11], %19 {strides = array<i32>} : memref<1x8x32xf32, #tpu.memory_space<vmem>>, vector<1x8x32xf32>,
    } else {
    }
    return
  }
  func.func @transform_0(%arg0: i32, %arg1: i32, %arg2: memref<2xi32, #tpu.memory_space<smem>>) -> (i32, i32, i32) {
    %c0_i32 = arith.constant 0 : i32
    %c0_i32_0 = arith.constant 0 : i32
    %c0_i32_1 = arith.constant 0 : i32
    return %arg0, %c0_i32, %c0_i32_0 : i32, i32, i32
  }
  func.func @transform_1(%arg0: i32, %arg1: i32, %arg2: memref<2xi32, #tpu.memory_space<smem>>) -> (i32, i32) {
    %c0_i32 = arith.constant 0 : i32
    %c0_i32_0 = arith.constant 0 : i32
    %c0_i32_1 = arith.constant 0 : i32
    return %c0_i32, %c0_i32_0 : i32, i32
  }
  func.func @transform_2(%arg0: i32, %arg1: i32, %arg2: memref<2xi32, #tpu.memory_space<smem>>) -> (i32, i32) {
    %c0_i32 = arith.constant 0 : i32
    %c0_i32_0 = arith.constant 0 : i32
    %c0_i32_1 = arith.constant 0 : i32
    return %c0_i32, %c0_i32_0 : i32, i32
  }
  func.func @transform_3(%arg0: i32, %arg1: i32, %arg2: memref<2xi32, #tpu.memory_space<smem>>) -> (i32, i32) {
    %c0_i32 = arith.constant 0 : i32
    %c0_i32_0 = arith.constant 0 : i32
    %c0_i32_1 = arith.constant 0 : i32
    return %c0_i32, %c0_i32_0 : i32, i32
  }
  func.func @transform_4(%arg0: i32, %arg1: i32, %arg2: memref<2xi32, #tpu.memory_space<smem>>) -> (i32, i32) {
    %c0_i32 = arith.constant 0 : i32
    %c0_i32_0 = arith.constant 0 : i32
    %c0_i32_1 = arith.constant 0 : i32
    return %c0_i32, %c0_i32_0 : i32, i32
  }
  func.func @transform_5(%arg0: i32, %arg1: i32, %arg2: memref<2xi32, #tpu.memory_space<smem>>) -> (i32, i32) {
    %c0_i32 = arith.constant 0 : i32
    %c0_i32_0 = arith.constant 0 : i32
    %c0_i32_1 = arith.constant 0 : i32
    return %c0_i32, %c0_i32_0 : i32, i32
  }
  func.func @transform_6(%arg0: i32, %arg1: i32, %arg2: memref<2xi32, #tpu.memory_space<smem>>) -> (i32, i32) {
    %c0_i32 = arith.constant 0 : i32
    %c0_i32_0 = arith.constant 0 : i32
    %c0_i32_1 = arith.constant 0 : i32
    return %c0_i32, %c0_i32_0 : i32, i32
  }
  func.func @transform_7(%arg0: i32, %arg1: i32, %arg2: memref<2xi32, #tpu.memory_space<smem>>) -> (i32, i32) {
    %c0_i32 = arith.constant 0 : i32
    %c0_i32_0 = arith.constant 0 : i32
    %c0_i32_1 = arith.constant 0 : i32
    return %c0_i32, %c0_i32_0 : i32, i32
  }
  func.func @transform_8(%arg0: i32, %arg1: i32, %arg2: memref<2xi32, #tpu.memory_space<smem>>) -> (i32, i32) {
    %c0_i32 = arith.constant 0 : i32
    %c0_i32_0 = arith.constant 0 : i32
    %c0_i32_1 = arith.constant 0 : i32
    return %c0_i32, %c0_i32_0 : i32, i32
  }
  func.func @transform_9(%arg0: i32, %arg1: i32, %arg2: memref<2xi32, #tpu.memory_space<smem>>) -> (i32, i32) {
    %c0_i32 = arith.constant 0 : i32
    %c0_i32_0 = arith.constant 0 : i32
    %c0_i32_1 = arith.constant 0 : i32
    return %c0_i32, %c0_i32_0 : i32, i32
  }
  func.func @transform_10(%arg0: i32, %arg1: i32, %arg2: memref<2xi32, #tpu.memory_space<smem>>) -> (i32, i32) {
    %c0_i32 = arith.constant 0 : i32
    %c0_i32_0 = arith.constant 0 : i32
    %c0_i32_1 = arith.constant 0 : i32
    return %c0_i32, %c0_i32_0 : i32, i32
  }
  func.func @transform_11(%arg0: i32, %arg1: i32, %arg2: memref<2xi32, #tpu.memory_space<smem>>) -> (i32, i32) {
    %c0_i32 = arith.constant 0 : i32
    %c0_i32_0 = arith.constant 0 : i32
    %c0_i32_1 = arith.constant 0 : i32
    return %c0_i32, %c0_i32_0 : i32, i32
  }
  func.func @transform_12(%arg0: i32, %arg1: i32, %arg2: memref<2xi32, #tpu.memory_space<smem>>) -> (i32, i32) {
    %c0_i32 = arith.constant 0 : i32
    %c0_i32_0 = arith.constant 0 : i32
    %c0_i32_1 = arith.constant 0 : i32
    return %c0_i32, %c0_i32_0 : i32, i32
  }
  func.func @transform_13(%arg0: i32, %arg1: i32, %arg2: memref<2xi32, #tpu.memory_space<smem>>) -> (i32, i32) {
    %c0_i32 = arith.constant 0 : i32
    %c0_i32_0 = arith.constant 0 : i32
    %c0_i32_1 = arith.constant 0 : i32
    return %c0_i32, %c0_i32_0 : i32, i32
  }
  func.func @transform_14(%arg0: i32, %arg1: i32, %arg2: memref<2xi32, #tpu.memory_space<smem>>) -> (i32, i32) {
    %c0_i32 = arith.constant 0 : i32
    %c0_i32_0 = arith.constant 0 : i32
    %c0_i32_1 = arith.constant 0 : i32
    return %c0_i32, %c0_i32_0 : i32, i32
  }
  func.func @transform_15(%arg0: i32, %arg1: i32, %arg2: memref<2xi32, #tpu.memory_space<smem>>) -> (i32, i32) {
    %c0_i32 = arith.constant 0 : i32
    %c0_i32_0 = arith.constant 0 : i32
    %c0_i32_1 = arith.constant 0 : i32
    return %c0_i32, %c0_i32_0 : i32, i32
  }
  func.func @transform_16(%arg0: i32, %arg1: i32, %arg2: memref<2xi32, #tpu.memory_space<smem>>) -> (i32, i32) {
    %c0_i32 = arith.constant 0 : i32
    %c0_i32_0 = arith.constant 0 : i32
    %c0_i32_1 = arith.constant 0 : i32
    return %c0_i32, %c0_i32_0 : i32, i32
  }
  func.func @transform_17(%arg0: i32, %arg1: i32, %arg2: memref<2xi32, #tpu.memory_space<smem>>) -> (i32, i32, i32) {
    %c0_i32 = arith.constant 0 : i32
    %c0_i32_0 = arith.constant 0 : i32
    return %arg0, %arg1, %c0_i32 : i32, i32, i32
  }
}

</mosaic_0001>

<llo_original>
// kernel: tpu_custom_call.1
$region0: #{tpu_custom_call.1}
  #allocation0 [shape = 'u32[]', space=smem, size = 0x4, offset = 0x4, fixed_abs, tag = 'smem constant byte address 0x4 - core index']
  #allocation1 [shape = 'u32[144,128]{1,0:T(1,128)}', space=vmem, size = 0x12000, scoped, tag = 'internal scratch']
  #allocation2 [shape = 'f32[8,32]{1,0:T(8,128)}', space=vmem, size = 0x1000, scoped, tag = 'scratch operand']
  #allocation3 [shape = 's32[1]{0}', space=sflag, size = 0x4, scoped, tag = 'scoped memory for tpu_custom_call.1']
  #allocation4 [shape = 'u8[512]{0}', space=smem, size = 0x200, scoped, tag = 'prefetched SMEM operand 0']
  %s0 = inlined_call_operand.hbm [shape: s32[2], index: 0, kind: input, shape index: {}]
  %s1 = inlined_call_operand.vmem [shape: f32[2,8,32], index: 1, kind: input, shape index: {}]
  %s2 = inlined_call_operand.vmem [shape: bf16[32,32], index: 2, kind: input, shape index: {}]
  %s3 = inlined_call_operand.hbm [shape: f32[1,32], index: 3, kind: input, shape index: {}]
  %s4 = inlined_call_operand.vmem [shape: bf16[32,32], index: 4, kind: input, shape index: {}]
  %s5 = inlined_call_operand.hbm [shape: f32[1,32], index: 5, kind: input, shape index: {}]
  %s6 = inlined_call_operand.vmem [shape: bf16[32,32], index: 6, kind: input, shape index: {}]
  %s7 = inlined_call_operand.hbm [shape: f32[1,32], index: 7, kind: input, shape index: {}]
  %s8 = inlined_call_operand.vmem [shape: bf16[32,32], index: 8, kind: input, shape index: {}]
  %s9 = inlined_call_operand.hbm [shape: f32[1,32], index: 9, kind: input, shape index: {}]
  %s10 = inlined_call_operand.vmem [shape: f32[1,32], index: 10, kind: input, shape index: {}]
  %s11 = inlined_call_operand.vmem [shape: f32[1,32], index: 11, kind: input, shape index: {}]
  %s12 = inlined_call_operand.vmem [shape: f32[1,32], index: 12, kind: input, shape index: {}]
  %s13 = inlined_call_operand.vmem [shape: f32[1,32], index: 13, kind: input, shape index: {}]
  %s14 = inlined_call_operand.vmem [shape: bf16[32,128], index: 14, kind: input, shape index: {}]
  %s15 = inlined_call_operand.vmem [shape: f32[1,128], index: 15, kind: input, shape index: {}]
  %s16 = inlined_call_operand.vmem [shape: bf16[128,32], index: 16, kind: input, shape index: {}]
  %s17 = inlined_call_operand.vmem [shape: f32[1,32], index: 17, kind: input, shape index: {}]
  %s18 = inlined_call_operand.hbm [shape: f32[2,8,32], index: 18, kind: output, shape index: {}]
  %s19 = sld [smem:[#allocation0]]
  $region133: #{tpu_custom_call.1} parent=0
    _
  %s21 = ssub.s32 1, %s19
  %s22 = scalar_select 0, %s21, %s19
  %24 = dma.hbm_to_smem %s0, 16, [#allocation4], [#allocation3]
  %25 = dma.done [#allocation3], 16
  %26 = sfence
  $region1: #{tpu_custom_call.1} parent=0
    #allocation5 [shape = 'u8[512]{0}', space=vmem, size = 0x400, scoped, tag = 'input window, operand 3, single buffered']
    #allocation6 [shape = 's32[2]{0}', space=sflag, size = 0x8, scoped, tag = 'scoped memory for tpu_custom_call.1']
    #allocation7 [shape = 's32[2]{0}', space=sflag, size = 0x8, scoped, tag = 'scoped memory for tpu_custom_call.1']
    #allocation8 [shape = 'u8[512]{0}', space=vmem, size = 0x400, scoped, tag = 'input window, operand 5, single buffered']
    #allocation9 [shape = 's32[1]{0}', space=sflag, size = 0x4, scoped, tag = 'scoped memory for tpu_custom_call.1']
    #allocation10 [shape = 'u8[512]{0}', space=vmem, size = 0x400, scoped, tag = 'input window, operand 7, single buffered']
    #allocation11 [shape = 'u8[512]{0}', space=vmem, size = 0x400, scoped, tag = 'input window, operand 9, single buffered']
    #allocation12 [shape = 's32[1]{0}', space=sflag, size = 0x4, scoped, tag = 'scoped memory for tpu_custom_call.1']
    #allocation13 [shape = 'u8[8192]{0}', space=vmem, size = 0x2000, scoped, tag = 'output window, operand 0']
    %27 = vsyncpa [#allocation6], 0
    %28 = vsyncpa [#allocation9], 0
    %29 = vsyncpa [#allocation12], 0
    %30 = vsyncpa [#allocation7], 0
    %s31 = scalar_lea.sflag [#allocation7], 1
    %32 = vsyncpa %s31, 0
    loop: start=0, step=1, limit=4
    $region2: #{tpu_custom_call.1} parent=1 // loop_pre_header
      _
    $region3: #{tpu_custom_call.1} parent=1 // loop_header
      %s34 = sphi 0, %s38
      %p35 = scmp.ge.s32.totalorder %s34, 4
      %s41 = sphi 0, %s53
      %s42 = sphi 0, %s49
      %s43 = sphi 0, %s41
      %s44 = sphi 0, %s42
      %s45 = sphi 0, %s43
      %s46 = sphi 0, %s44
      %s56 = sphi 0, %s58
      %s59 = sphi 0, %s56
      %s60 = sphi 0, %s59
      %s76 = sphi 0, %s60
      %s80 = sphi 0, %s80
      %s82 = sphi 0, %s80
      %s83 = sphi 0, %s82
      %s97 = sphi 0, %s83
      %s101 = sphi 0, %s101
      %s103 = sphi 0, %s101
      %s104 = sphi 0, %s103
      %s118 = sphi 0, %s104
      %s122 = sphi 0, %s122
      %s124 = sphi 0, %s122
      %s125 = sphi 0, %s124
      %s139 = sphi 0, %s125
      %s143 = sphi 0, %s143
      %s145 = sphi 0, %s143
      %s146 = sphi 0, %s145
      %s160 = sphi 0, %s146
      %s164 = sphi 0, %s164
      %s166 = sphi 0, %s164
      %s167 = sphi 0, %s166
      %s181 = sphi 0, %s167
      %s185 = sphi 0, %s185
      %s187 = sphi 0, %s185
      %s188 = sphi 0, %s187
      %s202 = sphi 0, %s188
      %s206 = sphi 0, %s206
      %s208 = sphi 0, %s206
      %s209 = sphi 0, %s208
      %s223 = sphi 0, %s209
      %s227 = sphi 0, %s227
      %s229 = sphi 0, %s227
      %s230 = sphi 0, %s229
      %s244 = sphi 0, %s230
      %s248 = sphi 0, %s248
      %s250 = sphi 0, %s248
      %s251 = sphi 0, %s250
      %s265 = sphi 0, %s251
      %s269 = sphi 0, %s269
      %s271 = sphi 0, %s269
      %s272 = sphi 0, %s271
      %s286 = sphi 0, %s272
      %s290 = sphi 0, %s290
      %s292 = sphi 0, %s290
      %s293 = sphi 0, %s292
      %s307 = sphi 0, %s293
      %s311 = sphi 0, %s311
      %s313 = sphi 0, %s311
      %s314 = sphi 0, %s313
      %s328 = sphi 0, %s314
      %s332 = sphi 0, %s332
      %s334 = sphi 0, %s332
      %s335 = sphi 0, %s334
      %s349 = sphi 0, %s335
      %s353 = sphi 0, %s353
      %s355 = sphi 0, %s353
      %s356 = sphi 0, %s355
      %s370 = sphi 0, %s356
      %s374 = sphi 0, %s374
      %s376 = sphi 0, %s374
      %s377 = sphi 0, %s376
      %s391 = sphi 0, %s377
      %s395 = sphi 0, %s395
      %s397 = sphi 0, %s395
      %s398 = sphi 0, %s397
      %s412 = sphi 0, %s398
      %s420 = sphi 0, %s422
      %s423 = sphi 0, %s420
      %s424 = sphi 0, %s423
      %s440 = sphi 0, %s424
    $region4: #{tpu_custom_call.1} parent=1 // loop_header_branch
      %37 = sbr.rel (%p35) target = $region8
    $region5: #{tpu_custom_call.1} parent=1 // loop_body
      %s39 = ssub.s32 %s34, 1
      %s40 = ssub.s32 %s34, 2
      %s47 = sadd.s32 1, %s42
      %p48 = scmp.ge.s32.totalorder %s47, 1
      %s49 = scalar_select %p48, 0, %s47
      %s50 = sadd.s32 1, %s41
      %s51 = scalar_select %p48, %s50, %s41
      %p52 = scmp.ge.s32.totalorder %s51, 2
      %s53 = scalar_select %p52, 0, %s51
      %s54 = ssub.s32 %s41, %s53
      %p55 = scmp.eq.s32.totalorder %s54, 0
      %s57 = sadd.s32 %s56, 1
      %s58 = scalar_select %p55, %s56, %s57
      %p61 = pneg %p55
      %p62 = scmp.eq.s32.totalorder %s34, 1
      %p63 = por %p61, %p62
      %p64 = scmp.ne.s32.totalorder %s56, %s59
      %p65 = scmp.eq.s32.totalorder %s34, 0
      %p66 = por %p64, %p65
      %p67 = scmp.ne.s32.totalorder %s56, %s59
      %p68 = scmp.eq.s32.totalorder %s39, 1
      %p69 = por %p67, %p68
      %p70 = scmp.ne.s32.totalorder %s59, %s60
      %p71 = scmp.eq.s32.totalorder %s39, 0
      %p72 = por %p70, %p71
      %p73 = scmp.ne.s32.totalorder %s59, %s60
      %p74 = scmp.eq.s32.totalorder %s40, 1
      %p75 = por %p73, %p74
      %p77 = scmp.ne.s32.totalorder %s60, %s76
      %p78 = scmp.eq.s32.totalorder %s40, 0
      %p79 = por %p77, %p78
      %s81 = sadd.s32 %s80, 1
      %p84 = scmp.eq.s32.totalorder %s34, 1
      %p85 = scmp.ne.s32.totalorder %s80, %s82
      %p86 = scmp.eq.s32.totalorder %s34, 0
      %p87 = por %p85, %p86
      %p88 = scmp.ne.s32.totalorder %s80, %s82
      %p89 = scmp.eq.s32.totalorder %s39, 1
      %p90 = por %p88, %p89
      %p91 = scmp.ne.s32.totalorder %s82, %s83
      %p92 = scmp.eq.s32.totalorder %s39, 0
      %p93 = por %p91, %p92
      %p94 = scmp.ne.s32.totalorder %s82, %s83
      %p95 = scmp.eq.s32.totalorder %s40, 1
      %p96 = por %p94, %p95
      %p98 = scmp.ne.s32.totalorder %s83, %s97
      %p99 = scmp.eq.s32.totalorder %s40, 0
      %p100 = por %p98, %p99
      %s102 = sadd.s32 %s101, 1
      %p105 = scmp.eq.s32.totalorder %s34, 1
      %p106 = scmp.ne.s32.totalorder %s101, %s103
      %p107 = scmp.eq.s32.totalorder %s34, 0
      %p108 = por %p106, %p107
      %p109 = scmp.ne.s32.totalorder %s101, %s103
      %p110 = scmp.eq.s32.totalorder %s39, 1
      %p111 = por %p109, %p110
      %p112 = scmp.ne.s32.totalorder %s103, %s104
      %p113 = scmp.eq.s32.totalorder %s39, 0
      %p114 = por %p112, %p113
      %p115 = scmp.ne.s32.totalorder %s103, %s104
      %p116 = scmp.eq.s32.totalorder %s40, 1
      %p117 = por %p115, %p116
      %p119 = scmp.ne.s32.totalorder %s104, %s118
      %p120 = scmp.eq.s32.totalorder %s40, 0
      %p121 = por %p119, %p120
      %s123 = sadd.s32 %s122, 1
      %p126 = scmp.eq.s32.totalorder %s34, 1
      %p127 = scmp.ne.s32.totalorder %s122, %s124
      %p128 = scmp.eq.s32.totalorder %s34, 0
      %p129 = por %p127, %p128
      %p130 = scmp.ne.s32.totalorder %s122, %s124
      %p131 = scmp.eq.s32.totalorder %s39, 1
      %p132 = por %p130, %p131
      %p133 = scmp.ne.s32.totalorder %s124, %s125
      %p134 = scmp.eq.s32.totalorder %s39, 0
      %p135 = por %p133, %p134
      %p136 = scmp.ne.s32.totalorder %s124, %s125
      %p137 = scmp.eq.s32.totalorder %s40, 1
      %p138 = por %p136, %p137
      %p140 = scmp.ne.s32.totalorder %s125, %s139
      %p141 = scmp.eq.s32.totalorder %s40, 0
      %p142 = por %p140, %p141
      %s144 = sadd.s32 %s143, 1
      %p147 = scmp.eq.s32.totalorder %s34, 1
      %p148 = scmp.ne.s32.totalorder %s143, %s145
      %p149 = scmp.eq.s32.totalorder %s34, 0
      %p150 = por %p148, %p149
      %p151 = scmp.ne.s32.totalorder %s143, %s145
      %p152 = scmp.eq.s32.totalorder %s39, 1
      %p153 = por %p151, %p152
      %p154 = scmp.ne.s32.totalorder %s145, %s146
      %p155 = scmp.eq.s32.totalorder %s39, 0
      %p156 = por %p154, %p155
      %p157 = scmp.ne.s32.totalorder %s145, %s146
      %p158 = scmp.eq.s32.totalorder %s40, 1
      %p159 = por %p157, %p158
      %p161 = scmp.ne.s32.totalorder %s146, %s160
      %p162 = scmp.eq.s32.totalorder %s40, 0
      %p163 = por %p161, %p162
      %s165 = sadd.s32 %s164, 1
      %p168 = scmp.eq.s32.totalorder %s34, 1
      %p169 = scmp.ne.s32.totalorder %s164, %s166
      %p170 = scmp.eq.s32.totalorder %s34, 0
      %p171 = por %p169, %p170
      %p172 = scmp.ne.s32.totalorder %s164, %s166
      %p173 = scmp.eq.s32.totalorder %s39, 1
      %p174 = por %p172, %p173
      %p175 = scmp.ne.s32.totalorder %s166, %s167
      %p176 = scmp.eq.s32.totalorder %s39, 0
      %p177 = por %p175, %p176
      %p178 = scmp.ne.s32.totalorder %s166, %s167
      %p179 = scmp.eq.s32.totalorder %s40, 1
      %p180 = por %p178, %p179
      %p182 = scmp.ne.s32.totalorder %s167, %s181
      %p183 = scmp.eq.s32.totalorder %s40, 0
      %p184 = por %p182, %p183
      %s186 = sadd.s32 %s185, 1
      %p189 = scmp.eq.s32.totalorder %s34, 1
      %p190 = scmp.ne.s32.totalorder %s185, %s187
      %p191 = scmp.eq.s32.totalorder %s34, 0
      %p192 = por %p190, %p191
      %p193 = scmp.ne.s32.totalorder %s185, %s187
      %p194 = scmp.eq.s32.totalorder %s39, 1
      %p195 = por %p193, %p194
      %p196 = scmp.ne.s32.totalorder %s187, %s188
      %p197 = scmp.eq.s32.totalorder %s39, 0
      %p198 = por %p196, %p197
      %p199 = scmp.ne.s32.totalorder %s187, %s188
      %p200 = scmp.eq.s32.totalorder %s40, 1
      %p201 = por %p199, %p200
      %p203 = scmp.ne.s32.totalorder %s188, %s202
      %p204 = scmp.eq.s32.totalorder %s40, 0
      %p205 = por %p203, %p204
      %s207 = sadd.s32 %s206, 1
      %p210 = scmp.eq.s32.totalorder %s34, 1
      %p211 = scmp.ne.s32.totalorder %s206, %s208
      %p212 = scmp.eq.s32.totalorder %s34, 0
      %p213 = por %p211, %p212
      %p214 = scmp.ne.s32.totalorder %s206, %s208
      %p215 = scmp.eq.s32.totalorder %s39, 1
      %p216 = por %p214, %p215
      %p217 = scmp.ne.s32.totalorder %s208, %s209
      %p218 = scmp.eq.s32.totalorder %s39, 0
      %p219 = por %p217, %p218
      %p220 = scmp.ne.s32.totalorder %s208, %s209
      %p221 = scmp.eq.s32.totalorder %s40, 1
      %p222 = por %p220, %p221
      %p224 = scmp.ne.s32.totalorder %s209, %s223
      %p225 = scmp.eq.s32.totalorder %s40, 0
      %p226 = por %p224, %p225
      %s228 = sadd.s32 %s227, 1
      %p231 = scmp.eq.s32.totalorder %s34, 1
      %p232 = scmp.ne.s32.totalorder %s227, %s229
      %p233 = scmp.eq.s32.totalorder %s34, 0
      %p234 = por %p232, %p233
      %p235 = scmp.ne.s32.totalorder %s227, %s229
      %p236 = scmp.eq.s32.totalorder %s39, 1
      %p237 = por %p235, %p236
      %p238 = scmp.ne.s32.totalorder %s229, %s230
      %p239 = scmp.eq.s32.totalorder %s39, 0
      %p240 = por %p238, %p239
      %p241 = scmp.ne.s32.totalorder %s229, %s230
      %p242 = scmp.eq.s32.totalorder %s40, 1
      %p243 = por %p241, %p242
      %p245 = scmp.ne.s32.totalorder %s230, %s244
      %p246 = scmp.eq.s32.totalorder %s40, 0
      %p247 = por %p245, %p246
      %s249 = sadd.s32 %s248, 1
      %p252 = scmp.eq.s32.totalorder %s34, 1
      %p253 = scmp.ne.s32.totalorder %s248, %s250
      %p254 = scmp.eq.s32.totalorder %s34, 0
      %p255 = por %p253, %p254
      %p256 = scmp.ne.s32.totalorder %s248, %s250
      %p257 = scmp.eq.s32.totalorder %s39, 1
      %p258 = por %p256, %p257
      %p259 = scmp.ne.s32.totalorder %s250, %s251
      %p260 = scmp.eq.s32.totalorder %s39, 0
      %p261 = por %p259, %p260
      %p262 = scmp.ne.s32.totalorder %s250, %s251
      %p263 = scmp.eq.s32.totalorder %s40, 1
      %p264 = por %p262, %p263
      %p266 = scmp.ne.s32.totalorder %s251, %s265
      %p267 = scmp.eq.s32.totalorder %s40, 0
      %p268 = por %p266, %p267
      %s270 = sadd.s32 %s269, 1
      %p273 = scmp.eq.s32.totalorder %s34, 1
      %p274 = scmp.ne.s32.totalorder %s269, %s271
      %p275 = scmp.eq.s32.totalorder %s34, 0
      %p276 = por %p274, %p275
      %p277 = scmp.ne.s32.totalorder %s269, %s271
      %p278 = scmp.eq.s32.totalorder %s39, 1
      %p279 = por %p277, %p278
      %p280 = scmp.ne.s32.totalorder %s271, %s272
      %p281 = scmp.eq.s32.totalorder %s39, 0
      %p282 = por %p280, %p281
      %p283 = scmp.ne.s32.totalorder %s271, %s272
      %p284 = scmp.eq.s32.totalorder %s40, 1
      %p285 = por %p283, %p284
      %p287 = scmp.ne.s32.totalorder %s272, %s286
      %p288 = scmp.eq.s32.totalorder %s40, 0
      %p289 = por %p287, %p288
      %s291 = sadd.s32 %s290, 1
      %p294 = scmp.eq.s32.totalorder %s34, 1
      %p295 = scmp.ne.s32.totalorder %s290, %s292
      %p296 = scmp.eq.s32.totalorder %s34, 0
      %p297 = por %p295, %p296
      %p298 = scmp.ne.s32.totalorder %s290, %s292
      %p299 = scmp.eq.s32.totalorder %s39, 1
      %p300 = por %p298, %p299
      %p301 = scmp.ne.s32.totalorder %s292, %s293
      %p302 = scmp.eq.s32.totalorder %s39, 0
      %p303 = por %p301, %p302
      %p304 = scmp.ne.s32.totalorder %s292, %s293
      %p305 = scmp.eq.s32.totalorder %s40, 1
      %p306 = por %p304, %p305
      %p308 = scmp.ne.s32.totalorder %s293, %s307
      %p309 = scmp.eq.s32.totalorder %s40, 0
      %p310 = por %p308, %p309
      %s312 = sadd.s32 %s311, 1
      %p315 = scmp.eq.s32.totalorder %s34, 1
      %p316 = scmp.ne.s32.totalorder %s311, %s313
      %p317 = scmp.eq.s32.totalorder %s34, 0
      %p318 = por %p316, %p317
      %p319 = scmp.ne.s32.totalorder %s311, %s313
      %p320 = scmp.eq.s32.totalorder %s39, 1
      %p321 = por %p319, %p320
      %p322 = scmp.ne.s32.totalorder %s313, %s314
      %p323 = scmp.eq.s32.totalorder %s39, 0
      %p324 = por %p322, %p323
      %p325 = scmp.ne.s32.totalorder %s313, %s314
      %p326 = scmp.eq.s32.totalorder %s40, 1
      %p327 = por %p325, %p326
      %p329 = scmp.ne.s32.totalorder %s314, %s328
      %p330 = scmp.eq.s32.totalorder %s40, 0
      %p331 = por %p329, %p330
      %s333 = sadd.s32 %s332, 1
      %p336 = scmp.eq.s32.totalorder %s34, 1
      %p337 = scmp.ne.s32.totalorder %s332, %s334
      %p338 = scmp.eq.s32.totalorder %s34, 0
      %p339 = por %p337, %p338
      %p340 = scmp.ne.s32.totalorder %s332, %s334
      %p341 = scmp.eq.s32.totalorder %s39, 1
      %p342 = por %p340, %p341
      %p343 = scmp.ne.s32.totalorder %s334, %s335
      %p344 = scmp.eq.s32.totalorder %s39, 0
      %p345 = por %p343, %p344
      %p346 = scmp.ne.s32.totalorder %s334, %s335
      %p347 = scmp.eq.s32.totalorder %s40, 1
      %p348 = por %p346, %p347
      %p350 = scmp.ne.s32.totalorder %s335, %s349
      %p351 = scmp.eq.s32.totalorder %s40, 0
      %p352 = por %p350, %p351
      %s354 = sadd.s32 %s353, 1
      %p357 = scmp.eq.s32.totalorder %s34, 1
      %p358 = scmp.ne.s32.totalorder %s353, %s355
      %p359 = scmp.eq.s32.totalorder %s34, 0
      %p360 = por %p358, %p359
      %p361 = scmp.ne.s32.totalorder %s353, %s355
      %p362 = scmp.eq.s32.totalorder %s39, 1
      %p363 = por %p361, %p362
      %p364 = scmp.ne.s32.totalorder %s355, %s356
      %p365 = scmp.eq.s32.totalorder %s39, 0
      %p366 = por %p364, %p365
      %p367 = scmp.ne.s32.totalorder %s355, %s356
      %p368 = scmp.eq.s32.totalorder %s40, 1
      %p369 = por %p367, %p368
      %p371 = scmp.ne.s32.totalorder %s356, %s370
      %p372 = scmp.eq.s32.totalorder %s40, 0
      %p373 = por %p371, %p372
      %s375 = sadd.s32 %s374, 1
      %p378 = scmp.eq.s32.totalorder %s34, 1
      %p379 = scmp.ne.s32.totalorder %s374, %s376
      %p380 = scmp.eq.s32.totalorder %s34, 0
      %p381 = por %p379, %p380
      %p382 = scmp.ne.s32.totalorder %s374, %s376
      %p383 = scmp.eq.s32.totalorder %s39, 1
      %p384 = por %p382, %p383
      %p385 = scmp.ne.s32.totalorder %s376, %s377
      %p386 = scmp.eq.s32.totalorder %s39, 0
      %p387 = por %p385, %p386
      %p388 = scmp.ne.s32.totalorder %s376, %s377
      %p389 = scmp.eq.s32.totalorder %s40, 1
      %p390 = por %p388, %p389
      %p392 = scmp.ne.s32.totalorder %s377, %s391
      %p393 = scmp.eq.s32.totalorder %s40, 0
      %p394 = por %p392, %p393
      %s396 = sadd.s32 %s395, 1
      %p399 = scmp.eq.s32.totalorder %s34, 1
      %p400 = scmp.ne.s32.totalorder %s395, %s397
      %p401 = scmp.eq.s32.totalorder %s34, 0
      %p402 = por %p400, %p401
      %p403 = scmp.ne.s32.totalorder %s395, %s397
      %p404 = scmp.eq.s32.totalorder %s39, 1
      %p405 = por %p403, %p404
      %p406 = scmp.ne.s32.totalorder %s397, %s398
      %p407 = scmp.eq.s32.totalorder %s39, 0
      %p408 = por %p406, %p407
      %p409 = scmp.ne.s32.totalorder %s397, %s398
      %p410 = scmp.eq.s32.totalorder %s40, 1
      %p411 = por %p409, %p410
      %p413 = scmp.ne.s32.totalorder %s398, %s412
      %p414 = scmp.eq.s32.totalorder %s40, 0
      %p415 = por %p413, %p414
      %s416 = ssub.s32 %s41, %s53
      %s417 = ssub.s32 %s42, %s49
      %s418 = sor.u32 %s416, %s417
      %p419 = scmp.eq.s32.totalorder %s418, 0
      %s421 = sadd.s32 %s420, 1
      %s422 = scalar_select %p419, %s420, %s421
      %p425 = pneg %p419
      %p426 = scmp.eq.s32.totalorder %s34, 1
      %p427 = por %p425, %p426
      %p428 = scmp.ne.s32.totalorder %s420, %s423
      %p429 = scmp.eq.s32.totalorder %s34, 0
      %p430 = por %p428, %p429
      %p431 = scmp.ne.s32.totalorder %s420, %s423
      %p432 = scmp.eq.s32.totalorder %s39, 1
      %p433 = por %p431, %p432
      %p434 = scmp.ne.s32.totalorder %s423, %s424
      %p435 = scmp.eq.s32.totalorder %s39, 0
      %p436 = por %p434, %p435
      %p437 = scmp.ne.s32.totalorder %s423, %s424
      %p438 = scmp.eq.s32.totalorder %s40, 1
      %p439 = por %p437, %p438
      %p441 = scmp.ne.s32.totalorder %s424, %s440
      %p442 = scmp.eq.s32.totalorder %s40, 0
      %p443 = por %p441, %p442
      %p444 = scmp.le.s32.totalorder 1, %s34
      %p445 = scmp.lt.s32.totalorder %s34, 3
      %p446 = pnand %p444, %p445
      %p447 = pneg %p446
      // Predicated region
      $region9: #{tpu_custom_call.1} parent=5 // pred_check
        _
      $region10: #{tpu_custom_call.1} parent=5 // pred_check_branch
        %449 = sbr.rel (%p446) target = $region12
      $region11: #{tpu_custom_call.1} parent=5 // pred_region
        %s450 = ssub.s32 %s34, 1
        // Predicated region
        $region13: #{tpu_custom_call.1} parent=11 // pred_check
          %p451 = pneg %p93
        $region14: #{tpu_custom_call.1} parent=11 // pred_check_branch
          %453 = sbr.rel (%p451) target = $region16
        $region15: #{tpu_custom_call.1} parent=11 // pred_region
          _
        $region16: #{tpu_custom_call.1} parent=11 // pred_fallthru
          _
        // Predicated region
        $region17: #{tpu_custom_call.1} parent=11 // pred_check
          %p454 = pneg %p114
        $region18: #{tpu_custom_call.1} parent=11 // pred_check_branch
          %456 = sbr.rel (%p454) target = $region20
        $region19: #{tpu_custom_call.1} parent=11 // pred_region
          %s458 = ssub.s32 16, 16
          %459 = vsyncadd [#allocation6], %s458
          %s461 = sshll.u32 [#allocation5], 4
          %s462 = int_to_ptr.vmem [resolvable:$true] %s461
          %464 = dma.hbm_to_vmem [thread:$0]  %s3, 16, %s462, [#allocation6]
        $region20: #{tpu_custom_call.1} parent=11 // pred_fallthru
          _
        // Predicated region
        $region21: #{tpu_custom_call.1} parent=11 // pred_check
          %p465 = pneg %p135
        $region22: #{tpu_custom_call.1} parent=11 // pred_check_branch
          %467 = sbr.rel (%p465) target = $region24
        $region23: #{tpu_custom_call.1} parent=11 // pred_region
          _
        $region24: #{tpu_custom_call.1} parent=11 // pred_fallthru
          _
        // Predicated region
        $region25: #{tpu_custom_call.1} parent=11 // pred_check
          %p468 = pneg %p156
        $region26: #{tpu_custom_call.1} parent=11 // pred_check_branch
          %470 = sbr.rel (%p468) target = $region28
        $region27: #{tpu_custom_call.1} parent=11 // pred_region
          %s472 = ssub.s32 16, 16
          %473 = vsyncadd [#allocation9], %s472
          %s475 = sshll.u32 [#allocation8], 4
          %s476 = int_to_ptr.vmem [resolvable:$true] %s475
          %478 = dma.hbm_to_vmem [thread:$0]  %s5, 16, %s476, [#allocation9]
        $region28: #{tpu_custom_call.1} parent=11 // pred_fallthru
          _
        // Predicated region
        $region29: #{tpu_custom_call.1} parent=11 // pred_check
          %p479 = pneg %p177
        $region30: #{tpu_custom_call.1} parent=11 // pred_check_branch
          %481 = sbr.rel (%p479) target = $region32
        $region31: #{tpu_custom_call.1} parent=11 // pred_region
          _
        $region32: #{tpu_custom_call.1} parent=11 // pred_fallthru
          _
        // Predicated region
        $region33: #{tpu_custom_call.1} parent=11 // pred_check
          %p482 = pneg %p198
        $region34: #{tpu_custom_call.1} parent=11 // pred_check_branch
          %484 = sbr.rel (%p482) target = $region36
        $region35: #{tpu_custom_call.1} parent=11 // pred_region
          %s486 = ssub.s32 16, 16
          %487 = vsyncadd [#allocation9], %s486
          %s489 = sshll.u32 [#allocation10], 4
          %s490 = int_to_ptr.vmem [resolvable:$true] %s489
          %492 = dma.hbm_to_vmem [thread:$0]  %s7, 16, %s490, [#allocation9]
        $region36: #{tpu_custom_call.1} parent=11 // pred_fallthru
          _
        // Predicated region
        $region37: #{tpu_custom_call.1} parent=11 // pred_check
          %p493 = pneg %p219
        $region38: #{tpu_custom_call.1} parent=11 // pred_check_branch
          %495 = sbr.rel (%p493) target = $region40
        $region39: #{tpu_custom_call.1} parent=11 // pred_region
          _
        $region40: #{tpu_custom_call.1} parent=11 // pred_fallthru
          _
        // Predicated region
        $region41: #{tpu_custom_call.1} parent=11 // pred_check
          %p496 = pneg %p240
        $region42: #{tpu_custom_call.1} parent=11 // pred_check_branch
          %498 = sbr.rel (%p496) target = $region44
        $region43: #{tpu_custom_call.1} parent=11 // pred_region
          %s500 = ssub.s32 16, 16
          %501 = vsyncadd [#allocation12], %s500
          %s503 = sshll.u32 [#allocation11], 4
          %s504 = int_to_ptr.vmem [resolvable:$true] %s503
          %506 = dma.hbm_to_vmem [thread:$0]  %s9, 16, %s504, [#allocation12]
        $region44: #{tpu_custom_call.1} parent=11 // pred_fallthru
          _
        // Predicated region
        $region45: #{tpu_custom_call.1} parent=11 // pred_check
          %p507 = pneg %p261
        $region46: #{tpu_custom_call.1} parent=11 // pred_check_branch
          %509 = sbr.rel (%p507) target = $region48
        $region47: #{tpu_custom_call.1} parent=11 // pred_region
          _
        $region48: #{tpu_custom_call.1} parent=11 // pred_fallthru
          _
        // Predicated region
        $region49: #{tpu_custom_call.1} parent=11 // pred_check
          %p510 = pneg %p282
        $region50: #{tpu_custom_call.1} parent=11 // pred_check_branch
          %512 = sbr.rel (%p510) target = $region52
        $region51: #{tpu_custom_call.1} parent=11 // pred_region
          _
        $region52: #{tpu_custom_call.1} parent=11 // pred_fallthru
          _
        // Predicated region
        $region53: #{tpu_custom_call.1} parent=11 // pred_check
          %p513 = pneg %p303
        $region54: #{tpu_custom_call.1} parent=11 // pred_check_branch
          %515 = sbr.rel (%p513) target = $region56
        $region55: #{tpu_custom_call.1} parent=11 // pred_region
          _
        $region56: #{tpu_custom_call.1} parent=11 // pred_fallthru
          _
        // Predicated region
        $region57: #{tpu_custom_call.1} parent=11 // pred_check
          %p516 = pneg %p324
        $region58: #{tpu_custom_call.1} parent=11 // pred_check_branch
          %518 = sbr.rel (%p516) target = $region60
        $region59: #{tpu_custom_call.1} parent=11 // pred_region
          _
        $region60: #{tpu_custom_call.1} parent=11 // pred_fallthru
          _
        // Predicated region
        $region61: #{tpu_custom_call.1} parent=11 // pred_check
          %p519 = pneg %p345
        $region62: #{tpu_custom_call.1} parent=11 // pred_check_branch
          %521 = sbr.rel (%p519) target = $region64
        $region63: #{tpu_custom_call.1} parent=11 // pred_region
          _
        $region64: #{tpu_custom_call.1} parent=11 // pred_fallthru
          _
        // Predicated region
        $region65: #{tpu_custom_call.1} parent=11 // pred_check
          %p522 = pneg %p366
        $region66: #{tpu_custom_call.1} parent=11 // pred_check_branch
          %524 = sbr.rel (%p522) target = $region68
        $region67: #{tpu_custom_call.1} parent=11 // pred_region
          _
        $region68: #{tpu_custom_call.1} parent=11 // pred_fallthru
          _
        // Predicated region
        $region69: #{tpu_custom_call.1} parent=11 // pred_check
          %p525 = pneg %p387
        $region70: #{tpu_custom_call.1} parent=11 // pred_check_branch
          %527 = sbr.rel (%p525) target = $region72
        $region71: #{tpu_custom_call.1} parent=11 // pred_region
          _
        $region72: #{tpu_custom_call.1} parent=11 // pred_fallthru
          _
        // Predicated region
        $region73: #{tpu_custom_call.1} parent=11 // pred_check
          %p528 = pneg %p408
        $region74: #{tpu_custom_call.1} parent=11 // pred_check_branch
          %530 = sbr.rel (%p528) target = $region76
        $region75: #{tpu_custom_call.1} parent=11 // pred_region
          _
        $region76: #{tpu_custom_call.1} parent=11 // pred_fallthru
          _
      $region12: #{tpu_custom_call.1} parent=5 // pred_fallthru
        _
      %p531 = scmp.lt.s32.totalorder %s34, 2
      // Predicated region
      $region77: #{tpu_custom_call.1} parent=5 // pred_check
        %p532 = pneg %p531
      $region78: #{tpu_custom_call.1} parent=5 // pred_check_branch
        %534 = sbr.rel (%p532) target = $region80
      $region79: #{tpu_custom_call.1} parent=5 // pred_region
        // Predicated region
        $region81: #{tpu_custom_call.1} parent=79 // pred_check
          %p535 = pneg %p66
        $region82: #{tpu_custom_call.1} parent=79 // pred_check_branch
          %537 = sbr.rel (%p535) target = $region84
        $region83: #{tpu_custom_call.1} parent=79 // pred_region
          %p538 = scmp.lt.s32.totalorder %s41, 1
          %s539 = scalar_select %p538, %s41, 1
          %s540 = smul.addr %s539, 8
          %s541 = scalar_lea.vmem %s1, %s540
        $region84: #{tpu_custom_call.1} parent=79 // pred_fallthru
          _
      $region80: #{tpu_custom_call.1} parent=5 // pred_fallthru
        _
      %p542 = scmp.le.s32.totalorder 1, %s34
      %p543 = scmp.lt.s32.totalorder %s34, 3
      %p544 = pnand %p542, %p543
      %p545 = pneg %p544
      // Predicated region
      $region85: #{tpu_custom_call.1} parent=5 // pred_check
        _
      $region86: #{tpu_custom_call.1} parent=5 // pred_check_branch
        %547 = sbr.rel (%p544) target = $region88
      $region87: #{tpu_custom_call.1} parent=5 // pred_region
        %s548 = ssub.s32 %s34, 1
        // Predicated region
        $region89: #{tpu_custom_call.1} parent=87 // pred_check
          %p549 = pneg %p114
        $region90: #{tpu_custom_call.1} parent=87 // pred_check_branch
          %551 = sbr.rel (%p549) target = $region92
        $region91: #{tpu_custom_call.1} parent=87 // pred_region
          %552 = dma.done [#allocation6], 16
        $region92: #{tpu_custom_call.1} parent=87 // pred_fallthru
          _
        // Predicated region
        $region93: #{tpu_custom_call.1} parent=87 // pred_check
          %p553 = pneg %p156
        $region94: #{tpu_custom_call.1} parent=87 // pred_check_branch
          %555 = sbr.rel (%p553) target = $region96
        $region95: #{tpu_custom_call.1} parent=87 // pred_region
          %556 = dma.done [#allocation9], 16
        $region96: #{tpu_custom_call.1} parent=87 // pred_fallthru
          _
        // Predicated region
        $region97: #{tpu_custom_call.1} parent=87 // pred_check
          %p557 = pneg %p198
        $region98: #{tpu_custom_call.1} parent=87 // pred_check_branch
          %559 = sbr.rel (%p557) target = $region100
        $region99: #{tpu_custom_call.1} parent=87 // pred_region
          %560 = dma.done [#allocation9], 16
        $region100: #{tpu_custom_call.1} parent=87 // pred_fallthru
          _
        // Predicated region
        $region101: #{tpu_custom_call.1} parent=87 // pred_check
          %p561 = pneg %p240
        $region102: #{tpu_custom_call.1} parent=87 // pred_check_branch
          %563 = sbr.rel (%p561) target = $region104
        $region103: #{tpu_custom_call.1} parent=87 // pred_region
          %564 = dma.done [#allocation12], 16
        $region104: #{tpu_custom_call.1} parent=87 // pred_fallthru
          _
        %p565 = scmp.lt.s32.totalorder %s43, 1
        %s566 = scalar_select %p565, %s43, 1
        %s567 = smul.addr %s566, 8
        %s568 = scalar_lea.vmem %s1, %s567
        %p569 = pneg %p72
        %p570 = pneg %p69
        %p571 = pneg %p93
        %p572 = pneg %p90
        %p573 = pneg %p114
        %p574 = pneg %p111
        %p575 = pneg %p135
        %p576 = pneg %p132
        %p577 = pneg %p156
        %p578 = pneg %p153
        %p579 = pneg %p177
        %p580 = pneg %p174
        %p581 = pneg %p198
        %p582 = pneg %p195
        %p583 = pneg %p219
        %p584 = pneg %p216
        %p585 = pneg %p240
        %p586 = pneg %p237
        %p587 = pneg %p261
        %p588 = pneg %p258
        %p589 = pneg %p282
        %p590 = pneg %p279
        %p591 = pneg %p303
        %p592 = pneg %p300
        %p593 = pneg %p324
        %p594 = pneg %p321
        %p595 = pneg %p345
        %p596 = pneg %p342
        %p597 = pneg %p366
        %p598 = pneg %p363
        %p599 = pneg %p387
        %p600 = pneg %p384
        %p601 = pneg %p408
        %p602 = pneg %p405
        %p603 = pneg %p436
        %p604 = pneg %p433
        %s605 = sand.u32 %s423, 1
        %s606 = scalar_lea.sflag [#allocation7], %s605
        %s607 = sand.u32 %s423, 1
        %s608 = smul.addr %s607, 8
        %s609 = scalar_lea.vmem [#allocation13], %s608
        %p610 = scmp.lt.s32.totalorder %s43, 1
        %s611 = scalar_select %p610, %s43, 1
        %s612 = smul.addr %s611, 8
        %s613 = scalar_lea.vmem %s1, %s612
        %s615 = smul.u32 %s44, 8
        %s616 = sld [smem:[#allocation4]]
        %s617 = sld [smem:[#allocation4 + $0x1]]
        %p618 = scmp.eq.s32.totalorder %s616, 0
        // Predicated region
        $region105: #{tpu_custom_call.1} parent=87 // pred_check
          %p619 = pneg %p618
        $region106: #{tpu_custom_call.1} parent=87 // pred_check_branch
          %621 = sbr.rel (%p619) target = $region108
        $region107: #{tpu_custom_call.1} parent=87 // pred_region
          %v622 = vld [vmem:[%s613] sm:$0xff]
          %s623 = scalar_lea.vmem %s613, %s615
          %v624 = vld [vmem:[%s623] sm:$0xff]
          %v625 = vld [vmem:[%s10] sm:$0x1]
          %v626 = vld [vmem:[%s11] sm:$0x1]
          %vm627 = vcmask 261120
          %v628 = vsel %vm627, %v622, 0.0
          %629 = vadd.xlane.f32.xlu0 %v628
          %v630 = vpop.xlane.xlu0 %629
          %v631 = vrcp.pop 32.0
          %v632 = vmul.f32 %v630, %v631
          %v633 = vsub.f32 %v622, %v632
          %v634 = vmul.f32 %v633, %v633
          %v635 = vsel %vm627, %v634, 0.0
          %636 = vadd.xlane.f32.xlu0 %v635
          %v637 = vpop.xlane.xlu0 %636
          %v638 = vmul.f32 %v637, %v631
          %v639 = vadd.f32 %v638, 1e-05
          %v640 = vrsqrt.pop %v639
          %v641 = vmul.f32 %v633, %v640
          %v643 = vlaneseq
          %v644 = vshrl.u32 %v643, 7
          %v645 = vsub.s32 0, %v644
          %v646 = vrot.slane %v625, %v645
          %v648 = vmul.f32 %v641, %v646
          %v650 = vlaneseq
          %v651 = vshrl.u32 %v650, 7
          %v652 = vsub.s32 0, %v651
          %v653 = vrot.slane %v626, %v652
          %v655 = vadd.f32 %v648, %v653
          %v656 = vsel %vm627, %v624, 0.0
          %657 = vadd.xlane.f32.xlu0 %v656
          %v658 = vpop.xlane.xlu0 %657
          %v659 = vmul.f32 %v658, %v631
          %v660 = vsub.f32 %v624, %v659
          %v661 = vmul.f32 %v660, %v660
          %v662 = vsel %vm627, %v661, 0.0
          %663 = vadd.xlane.f32.xlu0 %v662
          %v664 = vpop.xlane.xlu0 %663
          %v665 = vmul.f32 %v664, %v631
          %v666 = vadd.f32 %v665, 1e-05
          %v667 = vrsqrt.pop %v666
          %v668 = vmul.f32 %v660, %v667
          %v669 = vmul.f32 %v668, %v646
          %v670 = vadd.f32 %v669, %v653
          %v671 = vpack.c.bf16 %v655, %v655
          %v672 = vpack.c.bf16 %v670, %v670
          %v673 = vld [vmem:[%s2] sm:$0xf]
          %v674 = vld [vmem:[%s2 + $0x4] sm:$0xf]
          %v675 = vld [vmem:[%s2 + $0x8] sm:$0xf]
          %v676 = vld [vmem:[%s2 + $0xc] sm:$0xf]
          %v677 = vld [vmem:[#allocation5] sm:$0x1]
          %v679 = vlaneseq
          %v680 = vshrl.u32 %v679, 7
          %v681 = vsub.s32 0, %v680
          %v682 = vrot.slane %v677, %v681
          %v688 = vunpack.c.l.b16 %v673
          %v689 = vunpack.c.l.b16 %v674
          %v690 = vunpack.c.l.b16 %v675
          %v691 = vunpack.c.l.b16 %v676
          %v692 = vpack.c.b16 %v689, %v688
          %v693 = vpack.c.b16 %v691, %v690
          %v697 = vsel %vm627, %v672, 0
          %699 = vmatprep.subr.bf16.mxu0 0
          %700 = vmatpush1.bf16.msra.mxu0 0
          %701 = vmatprep.subr.bf16.mxu0 0
          %702 = vmatpush1.bf16.msra.mxu0 0
          %703 = vmatprep.subr.bf16.mxu0 0
          %704 = vmatpush1.bf16.msra.mxu0 0
          %705 = vmatprep.subr.bf16.mxu0 0
          %706 = vmatpush1.bf16.msra.mxu0 0
          %707 = vmatprep.subr.bf16.mxu0 0
          %708 = vmatpush1.bf16.msra.mxu0 0
          %709 = vmatprep.subr.bf16.mxu0 0
          %710 = vmatpush1.bf16.msra.mxu0 0
          %711 = vmatprep.subr.bf16.mxu0 0
          %712 = vmatpush1.bf16.msra.mxu0 %v693
          %713 = vmatprep.subr.bf16.mxu0 0
          %714 = vmatpush1.bf16.msra.mxu0 %v692
          %715 = vmatprep.subr.bf16.mxu0 0
          %716 = vmatpush2.bf16.msra.mxu0 0
          %717 = vmatprep.subr.bf16.mxu0 0
          %718 = vmatpush2.bf16.msra.mxu0 0
          %719 = vmatprep.subr.bf16.mxu0 0
          %720 = vmatpush2.bf16.msra.mxu0 0
          %721 = vmatprep.subr.bf16.mxu0 0
          %722 = vmatpush2.bf16.msra.mxu0 0
          %723 = vmatprep.subr.bf16.mxu0 0
          %724 = vmatpush2.bf16.msra.mxu0 0
          %725 = vmatprep.subr.bf16.mxu0 0
          %726 = vmatpush2.bf16.msra.mxu0 0
          %727 = vmatprep.subr.bf16.mxu0 0
          %728 = vmatpush2.bf16.msra.mxu0 0
          %729 = vmatprep.subr.bf16.mxu0 0
          %730 = vmatpush2.bf16.msra.mxu0 0
          %731 = vmatprep.mubr.bf16.mxu0 0
          %732 = vmatmul.mubr.bf16.gmra.mxu0 %v697
          %v733 = vpop.f32.mrf.mxu0
          %v734 = vadd.f32 %v682, %v733
          %v735 = vpop.f32.mrf.mxu0
          %v736 = vpop.f32.mrf.mxu0
          %v737 = vpop.f32.mrf.mxu0
          %738 = vdwg.mxu0
          %v739 = vld [vmem:[%s4] sm:$0xf]
          %v740 = vld [vmem:[%s4 + $0x4] sm:$0xf]
          %v741 = vld [vmem:[%s4 + $0x8] sm:$0xf]
          %v742 = vld [vmem:[%s4 + $0xc] sm:$0xf]
          %v743 = vld [vmem:[#allocation8] sm:$0x1]
          %v745 = vlaneseq
          %v746 = vshrl.u32 %v745, 7
          %v747 = vsub.s32 0, %v746
          %v748 = vrot.slane %v743, %v747
          %v754 = vunpack.c.l.b16 %v739
          %v755 = vunpack.c.l.b16 %v740
          %v756 = vunpack.c.l.b16 %v741
          %v757 = vunpack.c.l.b16 %v742
          %v758 = vpack.c.b16 %v755, %v754
          %v759 = vpack.c.b16 %v757, %v756
          %v763 = vsel %vm627, %v671, 0
          %765 = vmatprep.subr.bf16.mxu0 0
          %766 = vmatpush1.bf16.msra.mxu0 0
          %767 = vmatprep.subr.bf16.mxu0 0
          %768 = vmatpush1.bf16.msra.mxu0 0
          %769 = vmatprep.subr.bf16.mxu0 0
          %770 = vmatpush1.bf16.msra.mxu0 0
          %771 = vmatprep.subr.bf16.mxu0 0
          %772 = vmatpush1.bf16.msra.mxu0 0
          %773 = vmatprep.subr.bf16.mxu0 0
          %774 = vmatpush1.bf16.msra.mxu0 0
          %775 = vmatprep.subr.bf16.mxu0 0
          %776 = vmatpush1.bf16.msra.mxu0 0
          %777 = vmatprep.subr.bf16.mxu0 0
          %778 = vmatpush1.bf16.msra.mxu0 %v759
          %779 = vmatprep.subr.bf16.mxu0 0
          %780 = vmatpush1.bf16.msra.mxu0 %v758
          %781 = vmatprep.subr.bf16.mxu0 0
          %782 = vmatpush2.bf16.msra.mxu0 0
          %783 = vmatprep.subr.bf16.mxu0 0
          %784 = vmatpush2.bf16.msra.mxu0 0
          %785 = vmatprep.subr.bf16.mxu0 0
          %786 = vmatpush2.bf16.msra.mxu0 0
          %787 = vmatprep.subr.bf16.mxu0 0
          %788 = vmatpush2.bf16.msra.mxu0 0
          %789 = vmatprep.subr.bf16.mxu0 0
          %790 = vmatpush2.bf16.msra.mxu0 0
          %791 = vmatprep.subr.bf16.mxu0 0
          %792 = vmatpush2.bf16.msra.mxu0 0
          %793 = vmatprep.subr.bf16.mxu0 0
          %794 = vmatpush2.bf16.msra.mxu0 0
          %795 = vmatprep.subr.bf16.mxu0 0
          %796 = vmatpush2.bf16.msra.mxu0 0
          %797 = vmatprep.mubr.bf16.mxu0 0
          %798 = vmatmul.mubr.bf16.gmra.mxu0 %v763
          %v799 = vpop.f32.mrf.mxu0
          %v800 = vadd.f32 %v748, %v799
          %v801 = vpop.f32.mrf.mxu0
          %v802 = vpop.f32.mrf.mxu0
          %v803 = vpop.f32.mrf.mxu0
          %804 = vdwg.mxu0
          %v805 = vld [vmem:[%s6] sm:$0xf]
          %v806 = vld [vmem:[%s6 + $0x4] sm:$0xf]
          %v807 = vld [vmem:[%s6 + $0x8] sm:$0xf]
          %v808 = vld [vmem:[%s6 + $0xc] sm:$0xf]
          %v809 = vld [vmem:[#allocation10] sm:$0x1]
          %v811 = vlaneseq
          %v812 = vshrl.u32 %v811, 7
          %v813 = vsub.s32 0, %v812
          %v814 = vrot.slane %v809, %v813
          %v820 = vunpack.c.l.b16 %v805
          %v821 = vunpack.c.l.b16 %v806
          %v822 = vunpack.c.l.b16 %v807
          %v823 = vunpack.c.l.b16 %v808
          %v824 = vpack.c.b16 %v821, %v820
          %v825 = vpack.c.b16 %v823, %v822
          %828 = vmatprep.subr.bf16.mxu0 0
          %829 = vmatpush1.bf16.msra.mxu0 0
          %830 = vmatprep.subr.bf16.mxu0 0
          %831 = vmatpush1.bf16.msra.mxu0 0
          %832 = vmatprep.subr.bf16.mxu0 0
          %833 = vmatpush1.bf16.msra.mxu0 0
          %834 = vmatprep.subr.bf16.mxu0 0
          %835 = vmatpush1.bf16.msra.mxu0 0
          %836 = vmatprep.subr.bf16.mxu0 0
          %837 = vmatpush1.bf16.msra.mxu0 0
          %838 = vmatprep.subr.bf16.mxu0 0
          %839 = vmatpush1.bf16.msra.mxu0 0
          %840 = vmatprep.subr.bf16.mxu0 0
          %841 = vmatpush1.bf16.msra.mxu0 %v825
          %842 = vmatprep.subr.bf16.mxu0 0
          %843 = vmatpush1.bf16.msra.mxu0 %v824
          %844 = vmatprep.subr.bf16.mxu0 0
          %845 = vmatpush2.bf16.msra.mxu0 0
          %846 = vmatprep.subr.bf16.mxu0 0
          %847 = vmatpush2.bf16.msra.mxu0 0
          %848 = vmatprep.subr.bf16.mxu0 0
          %849 = vmatpush2.bf16.msra.mxu0 0
          %850 = vmatprep.subr.bf16.mxu0 0
          %851 = vmatpush2.bf16.msra.mxu0 0
          %852 = vmatprep.subr.bf16.mxu0 0
          %853 = vmatpush2.bf16.msra.mxu0 0
          %854 = vmatprep.subr.bf16.mxu0 0
          %855 = vmatpush2.bf16.msra.mxu0 0
          %856 = vmatprep.subr.bf16.mxu0 0
          %857 = vmatpush2.bf16.msra.mxu0 0
          %858 = vmatprep.subr.bf16.mxu0 0
          %859 = vmatpush2.bf16.msra.mxu0 0
          %860 = vmatprep.mubr.bf16.mxu0 0
          %861 = vmatmul.mubr.bf16.gmra.mxu0 %v763
          %v862 = vpop.f32.mrf.mxu0
          %v863 = vadd.f32 %v814, %v862
          %v864 = vpop.f32.mrf.mxu0
          %v865 = vpop.f32.mrf.mxu0
          %v866 = vpop.f32.mrf.mxu0
          %867 = vdwg.mxu0
          %869 = vrot.lane.b32.xlu0 %v734, 120
          %v870 = vpop.permute.xlu0 %869
          %872 = vrot.lane.b32.xlu0 %v734, 112
          %v873 = vpop.permute.xlu0 %872
          %875 = vrot.lane.b32.xlu0 %v734, 104
          %v876 = vpop.permute.xlu0 %875
          %v878 = vpack.c.bf16 %v734, %v734
          %v879 = vpack.c.bf16 %v870, %v870
          %v880 = vpack.c.bf16 %v873, %v873
          %v881 = vpack.c.bf16 %v876, %v876
          %883 = vrot.lane.b32.xlu0 %v800, 120
          %v884 = vpop.permute.xlu0 %883
          %886 = vrot.lane.b32.xlu0 %v800, 112
          %v887 = vpop.permute.xlu0 %886
          %889 = vrot.lane.b32.xlu0 %v800, 104
          %v890 = vpop.permute.xlu0 %889
          %v892 = vpack.c.bf16 %v800, %v800
          %v893 = vpack.c.bf16 %v884, %v884
          %v894 = vpack.c.bf16 %v887, %v887
          %v895 = vpack.c.bf16 %v890, %v890
          %897 = vrot.lane.b32.xlu0 %v863, 120
          %v898 = vpop.permute.xlu0 %897
          %900 = vrot.lane.b32.xlu0 %v863, 112
          %v901 = vpop.permute.xlu0 %900
          %903 = vrot.lane.b32.xlu0 %v863, 104
          %v904 = vpop.permute.xlu0 %903
          %v906 = vpack.c.bf16 %v863, %v863
          %v907 = vpack.c.bf16 %v898, %v898
          %v908 = vpack.c.bf16 %v901, %v901
          %v909 = vpack.c.bf16 %v904, %v904
          %vm910 = vcmask 64512
          %v912 = vsel %vm910, %v878, 0
          %v915 = vsel %vm910, %v892, 0
          %917 = vmatprep.subr.bf16.mxu0 0
          %918 = vmatpush1.bf16.xpose.msra.mxu0 0
          %919 = vmatprep.subr.bf16.mxu0 0
          %920 = vmatpush1.bf16.xpose.msra.mxu0 0
          %921 = vmatprep.subr.bf16.mxu0 0
          %922 = vmatpush1.bf16.xpose.msra.mxu0 0
          %923 = vmatprep.subr.bf16.mxu0 0
          %924 = vmatpush1.bf16.xpose.msra.mxu0 0
          %925 = vmatprep.subr.bf16.mxu0 0
          %926 = vmatpush1.bf16.xpose.msra.mxu0 0
          %927 = vmatprep.subr.bf16.mxu0 0
          %928 = vmatpush1.bf16.xpose.msra.mxu0 0
          %929 = vmatprep.subr.bf16.mxu0 0
          %930 = vmatpush1.bf16.xpose.msra.mxu0 0
          %931 = vmatprep.subr.bf16.mxu0 0
          %932 = vmatpush1.bf16.xpose.msra.mxu0 %v915
          %933 = vmatprep.subr.bf16.mxu0 0
          %934 = vmatpush2.bf16.xpose.msra.mxu0 0
          %935 = vmatprep.subr.bf16.mxu0 0
          %936 = vmatpush2.bf16.xpose.msra.mxu0 0
          %937 = vmatprep.subr.bf16.mxu0 0
          %938 = vmatpush2.bf16.xpose.msra.mxu0 0
          %939 = vmatprep.subr.bf16.mxu0 0
          %940 = vmatpush2.bf16.xpose.msra.mxu0 0
          %941 = vmatprep.subr.bf16.mxu0 0
          %942 = vmatpush2.bf16.xpose.msra.mxu0 0
          %943 = vmatprep.subr.bf16.mxu0 0
          %944 = vmatpush2.bf16.xpose.msra.mxu0 0
          %945 = vmatprep.subr.bf16.mxu0 0
          %946 = vmatpush2.bf16.xpose.msra.mxu0 0
          %947 = vmatprep.subr.bf16.mxu0 0
          %948 = vmatpush2.bf16.xpose.msra.mxu0 0
          %949 = vmatprep.mubr.bf16.mxu0 0
          %950 = vmatmul.mubr.bf16.gmra.mxu0 %v912
          %v951 = vpop.f32.mrf.mxu0
          %v952 = vadd.f32 0.0, %v951
          %v953 = vpop.f32.mrf.mxu0
          %v954 = vpop.f32.mrf.mxu0
          %v955 = vpop.f32.mrf.mxu0
          %956 = vdwg.mxu0
          %v958 = vsel %vm910, %v879, 0
          %v961 = vsel %vm910, %v893, 0
          %963 = vmatprep.subr.bf16.mxu0 0
          %964 = vmatpush1.bf16.xpose.msra.mxu0 0
          %965 = vmatprep.subr.bf16.mxu0 0
          %966 = vmatpush1.bf16.xpose.msra.mxu0 0
          %967 = vmatprep.subr.bf16.mxu0 0
          %968 = vmatpush1.bf16.xpose.msra.mxu0 0
          %969 = vmatprep.subr.bf16.mxu0 0
          %970 = vmatpush1.bf16.xpose.msra.mxu0 0
          %971 = vmatprep.subr.bf16.mxu0 0
          %972 = vmatpush1.bf16.xpose.msra.mxu0 0
          %973 = vmatprep.subr.bf16.mxu0 0
          %974 = vmatpush1.bf16.xpose.msra.mxu0 0
          %975 = vmatprep.subr.bf16.mxu0 0
          %976 = vmatpush1.bf16.xpose.msra.mxu0 0
          %977 = vmatprep.subr.bf16.mxu0 0
          %978 = vmatpush1.bf16.xpose.msra.mxu0 %v961
          %979 = vmatprep.subr.bf16.mxu0 0
          %980 = vmatpush2.bf16.xpose.msra.mxu0 0
          %981 = vmatprep.subr.bf16.mxu0 0
          %982 = vmatpush2.bf16.xpose.msra.mxu0 0
          %983 = vmatprep.subr.bf16.mxu0 0
          %984 = vmatpush2.bf16.xpose.msra.mxu0 0
          %985 = vmatprep.subr.bf16.mxu0 0
          %986 = vmatpush2.bf16.xpose.msra.mxu0 0
          %987 = vmatprep.subr.bf16.mxu0 0
          %988 = vmatpush2.bf16.xpose.msra.mxu0 0
          %989 = vmatprep.subr.bf16.mxu0 0
          %990 = vmatpush2.bf16.xpose.msra.mxu0 0
          %991 = vmatprep.subr.bf16.mxu0 0
          %992 = vmatpush2.bf16.xpose.msra.mxu0 0
          %993 = vmatprep.subr.bf16.mxu0 0
          %994 = vmatpush2.bf16.xpose.msra.mxu0 0
          %995 = vmatprep.mubr.bf16.mxu0 0
          %996 = vmatmul.mubr.bf16.gmra.mxu0 %v958
          %v997 = vpop.f32.mrf.mxu0
          %v998 = vadd.f32 0.0, %v997
          %v999 = vpop.f32.mrf.mxu0
          %v1000 = vpop.f32.mrf.mxu0
          %v1001 = vpop.f32.mrf.mxu0
          %1002 = vdwg.mxu0
          %v1004 = vsel %vm910, %v880, 0
          %v1007 = vsel %vm910, %v894, 0
          %1009 = vmatprep.subr.bf16.mxu0 0
          %1010 = vmatpush1.bf16.xpose.msra.mxu0 0
          %1011 = vmatprep.subr.bf16.mxu0 0
          %1012 = vmatpush1.bf16.xpose.msra.mxu0 0
          %1013 = vmatprep.subr.bf16.mxu0 0
          %1014 = vmatpush1.bf16.xpose.msra.mxu0 0
          %1015 = vmatprep.subr.bf16.mxu0 0
          %1016 = vmatpush1.bf16.xpose.msra.mxu0 0
          %1017 = vmatprep.subr.bf16.mxu0 0
          %1018 = vmatpush1.bf16.xpose.msra.mxu0 0
          %1019 = vmatprep.subr.bf16.mxu0 0
          %1020 = vmatpush1.bf16.xpose.msra.mxu0 0
          %1021 = vmatprep.subr.bf16.mxu0 0
          %1022 = vmatpush1.bf16.xpose.msra.mxu0 0
          %1023 = vmatprep.subr.bf16.mxu0 0
          %1024 = vmatpush1.bf16.xpose.msra.mxu0 %v1007
          %1025 = vmatprep.subr.bf16.mxu0 0
          %1026 = vmatpush2.bf16.xpose.msra.mxu0 0
          %1027 = vmatprep.subr.bf16.mxu0 0
          %1028 = vmatpush2.bf16.xpose.msra.mxu0 0
          %1029 = vmatprep.subr.bf16.mxu0 0
          %1030 = vmatpush2.bf16.xpose.msra.mxu0 0
          %1031 = vmatprep.subr.bf16.mxu0 0
          %1032 = vmatpush2.bf16.xpose.msra.mxu0 0
          %1033 = vmatprep.subr.bf16.mxu0 0
          %1034 = vmatpush2.bf16.xpose.msra.mxu0 0
          %1035 = vmatprep.subr.bf16.mxu0 0
          %1036 = vmatpush2.bf16.xpose.msra.mxu0 0
          %1037 = vmatprep.subr.bf16.mxu0 0
          %1038 = vmatpush2.bf16.xpose.msra.mxu0 0
          %1039 = vmatprep.subr.bf16.mxu0 0
          %1040 = vmatpush2.bf16.xpose.msra.mxu0 0
          %1041 = vmatprep.mubr.bf16.mxu0 0
          %1042 = vmatmul.mubr.bf16.gmra.mxu0 %v1004
          %v1043 = vpop.f32.mrf.mxu0
          %v1044 = vadd.f32 0.0, %v1043
          %v1045 = vpop.f32.mrf.mxu0
          %v1046 = vpop.f32.mrf.mxu0
          %v1047 = vpop.f32.mrf.mxu0
          %1048 = vdwg.mxu0
          %v1050 = vsel %vm910, %v881, 0
          %v1053 = vsel %vm910, %v895, 0
          %1055 = vmatprep.subr.bf16.mxu0 0
          %1056 = vmatpush1.bf16.xpose.msra.mxu0 0
          %1057 = vmatprep.subr.bf16.mxu0 0
          %1058 = vmatpush1.bf16.xpose.msra.mxu0 0
          %1059 = vmatprep.subr.bf16.mxu0 0
          %1060 = vmatpush1.bf16.xpose.msra.mxu0 0
          %1061 = vmatprep.subr.bf16.mxu0 0
          %1062 = vmatpush1.bf16.xpose.msra.mxu0 0
          %1063 = vmatprep.subr.bf16.mxu0 0
          %1064 = vmatpush1.bf16.xpose.msra.mxu0 0
          %1065 = vmatprep.subr.bf16.mxu0 0
          %1066 = vmatpush1.bf16.xpose.msra.mxu0 0
          %1067 = vmatprep.subr.bf16.mxu0 0
          %1068 = vmatpush1.bf16.xpose.msra.mxu0 0
          %1069 = vmatprep.subr.bf16.mxu0 0
          %1070 = vmatpush1.bf16.xpose.msra.mxu0 %v1053
          %1071 = vmatprep.subr.bf16.mxu0 0
          %1072 = vmatpush2.bf16.xpose.msra.mxu0 0
          %1073 = vmatprep.subr.bf16.mxu0 0
          %1074 = vmatpush2.bf16.xpose.msra.mxu0 0
          %1075 = vmatprep.subr.bf16.mxu0 0
          %1076 = vmatpush2.bf16.xpose.msra.mxu0 0
          %1077 = vmatprep.subr.bf16.mxu0 0
          %1078 = vmatpush2.bf16.xpose.msra.mxu0 0
          %1079 = vmatprep.subr.bf16.mxu0 0
          %1080 = vmatpush2.bf16.xpose.msra.mxu0 0
          %1081 = vmatprep.subr.bf16.mxu0 0
          %1082 = vmatpush2.bf16.xpose.msra.mxu0 0
          %1083 = vmatprep.subr.bf16.mxu0 0
          %1084 = vmatpush2.bf16.xpose.msra.mxu0 0
          %1085 = vmatprep.subr.bf16.mxu0 0
          %1086 = vmatpush2.bf16.xpose.msra.mxu0 0
          %1087 = vmatprep.mubr.bf16.mxu0 0
          %1088 = vmatmul.mubr.bf16.gmra.mxu0 %v1050
          %v1089 = vpop.f32.mrf.mxu0
          %v1090 = vadd.f32 0.0, %v1089
          %v1091 = vpop.f32.mrf.mxu0
          %v1092 = vpop.f32.mrf.mxu0
          %v1093 = vpop.f32.mrf.mxu0
          %1094 = vdwg.mxu0
          %v1095 = vmul.f32 %v952, 0.35355338
          %v1096 = vmul.f32 %v998, 0.35355338
          %v1097 = vmul.f32 %v1044, 0.35355338
          %v1098 = vmul.f32 %v1090, 0.35355338
          %v1099 = vlaneseq
          %v1100 = vshrl.u32 %v1099, 7
          %v1101 = vstv %s615
          %v1102 = vadd.s32 %v1101, %v1100
          %v1103 = vlaneseq
          %v1104 = vand.u32 %v1103, 127
          %vm1105 = vcmp.ge.s32.totalorder %v1102, %v1104
          %v1106 = vsel %vm1105, 1, 0
          %vm1107 = vcmp.eq.s32.totalorder %v1106, 1
          %v1108 = vsel %vm1107, %v1095, -1e+30
          %v1109 = vsel %vm1107, %v1096, -1e+30
          %v1110 = vsel %vm1107, %v1097, -1e+30
          %v1111 = vsel %vm1107, %v1098, -1e+30
          %v1112 = vsel %vm910, %v1108, -inf
          %1113 = vmax.xlane.f32.xlu0 %v1112
          %v1114 = vpop.xlane.xlu0 %1113
          %v1115 = vsel %vm910, %v1109, -inf
          %1116 = vmax.xlane.f32.xlu0 %v1115
          %v1117 = vpop.xlane.xlu0 %1116
          %v1118 = vsel %vm910, %v1110, -inf
          %1119 = vmax.xlane.f32.xlu0 %v1118
          %v1120 = vpop.xlane.xlu0 %1119
          %v1121 = vsel %vm910, %v1111, -inf
          %1122 = vmax.xlane.f32.xlu0 %v1121
          %v1123 = vpop.xlane.xlu0 %1122
          %v1124 = vsub.f32 %v1108, %v1114
          %v1125 = vsub.f32 %v1109, %v1117
          %v1126 = vsub.f32 %v1110, %v1120
          %v1127 = vsub.f32 %v1111, %v1123
          %v1128 = vmul.f32 %v1124, 1.442695
          %v1129 = vpow.pop %v1128
          %v1130 = vmul.f32 %v1125, 1.442695
          %v1131 = vpow.pop %v1130
          %v1132 = vmul.f32 %v1126, 1.442695
          %v1133 = vpow.pop %v1132
          %v1134 = vmul.f32 %v1127, 1.442695
          %v1135 = vpow.pop %v1134
          %v1136 = vsel %vm910, %v1129, 0.0
          %1137 = vadd.xlane.f32.xlu0 %v1136
          %v1138 = vpop.xlane.xlu0 %1137
          %v1139 = vsel %vm910, %v1131, 0.0
          %1140 = vadd.xlane.f32.xlu0 %v1139
          %v1141 = vpop.xlane.xlu0 %1140
          %v1142 = vsel %vm910, %v1133, 0.0
          %1143 = vadd.xlane.f32.xlu0 %v1142
          %v1144 = vpop.xlane.xlu0 %1143
          %v1145 = vsel %vm910, %v1135, 0.0
          %1146 = vadd.xlane.f32.xlu0 %v1145
          %v1147 = vpop.xlane.xlu0 %1146
          %v1148 = vrcp.pop %v1138
          %v1149 = vrcp.pop %v1141
          %v1150 = vrcp.pop %v1144
          %v1151 = vrcp.pop %v1147
          %v1152 = vmul.f32 %v1129, %v1148
          %v1153 = vmul.f32 %v1131, %v1149
          %v1154 = vmul.f32 %v1133, %v1150
          %v1155 = vmul.f32 %v1135, %v1151
          %v1156 = vpack.c.bf16 %v1152, %v1152
          %v1157 = vpack.c.bf16 %v1153, %v1153
          %v1158 = vpack.c.bf16 %v1154, %v1154
          %v1159 = vpack.c.bf16 %v1155, %v1155
          %v1161 = vsel %vm910, %v1156, 0
          %vm1163 = vcmask 1043456
          %v1165 = vsel %vm1163, %v906, 0
          %1167 = vmatprep.subr.bf16.mxu0 0
          %1168 = vmatpush1.bf16.msra.mxu0 0
          %1169 = vmatprep.subr.bf16.mxu0 0
          %1170 = vmatpush1.bf16.msra.mxu0 0
          %1171 = vmatprep.subr.bf16.mxu0 0
          %1172 = vmatpush1.bf16.msra.mxu0 0
          %1173 = vmatprep.subr.bf16.mxu0 0
          %1174 = vmatpush1.bf16.msra.mxu0 0
          %1175 = vmatprep.subr.bf16.mxu0 0
          %1176 = vmatpush1.bf16.msra.mxu0 0
          %1177 = vmatprep.subr.bf16.mxu0 0
          %1178 = vmatpush1.bf16.msra.mxu0 0
          %1179 = vmatprep.subr.bf16.mxu0 0
          %1180 = vmatpush1.bf16.msra.mxu0 0
          %1181 = vmatprep.subr.bf16.mxu0 0
          %1182 = vmatpush1.bf16.msra.mxu0 %v1165
          %1183 = vmatprep.subr.bf16.mxu0 0
          %1184 = vmatpush2.bf16.msra.mxu0 0
          %1185 = vmatprep.subr.bf16.mxu0 0
          %1186 = vmatpush2.bf16.msra.mxu0 0
          %1187 = vmatprep.subr.bf16.mxu0 0
          %1188 = vmatpush2.bf16.msra.mxu0 0
          %1189 = vmatprep.subr.bf16.mxu0 0
          %1190 = vmatpush2.bf16.msra.mxu0 0
          %1191 = vmatprep.subr.bf16.mxu0 0
          %1192 = vmatpush2.bf16.msra.mxu0 0
          %1193 = vmatprep.subr.bf16.mxu0 0
          %1194 = vmatpush2.bf16.msra.mxu0 0
          %1195 = vmatprep.subr.bf16.mxu0 0
          %1196 = vmatpush2.bf16.msra.mxu0 0
          %1197 = vmatprep.subr.bf16.mxu0 0
          %1198 = vmatpush2.bf16.msra.mxu0 0
          %1199 = vmatprep.mubr.bf16.mxu0 0
          %1200 = vmatmul.mubr.bf16.gmra.mxu0 %v1161
          %v1201 = vpop.f32.mrf.mxu0
          %v1202 = vadd.f32 0.0, %v1201
          %v1203 = vpop.f32.mrf.mxu0
          %v1204 = vpop.f32.mrf.mxu0
          %v1205 = vpop.f32.mrf.mxu0
          %1206 = vdwg.mxu0
          %v1208 = vsel %vm910, %v1157, 0
          %v1211 = vsel %vm1163, %v907, 0
          %1213 = vmatprep.subr.bf16.mxu0 0
          %1214 = vmatpush1.bf16.msra.mxu0 0
          %1215 = vmatprep.subr.bf16.mxu0 0
          %1216 = vmatpush1.bf16.msra.mxu0 0
          %1217 = vmatprep.subr.bf16.mxu0 0
          %1218 = vmatpush1.bf16.msra.mxu0 0
          %1219 = vmatprep.subr.bf16.mxu0 0
          %1220 = vmatpush1.bf16.msra.mxu0 0
          %1221 = vmatprep.subr.bf16.mxu0 0
          %1222 = vmatpush1.bf16.msra.mxu0 0
          %1223 = vmatprep.subr.bf16.mxu0 0
          %1224 = vmatpush1.bf16.msra.mxu0 0
          %1225 = vmatprep.subr.bf16.mxu0 0
          %1226 = vmatpush1.bf16.msra.mxu0 0
          %1227 = vmatprep.subr.bf16.mxu0 0
          %1228 = vmatpush1.bf16.msra.mxu0 %v1211
          %1229 = vmatprep.subr.bf16.mxu0 0
          %1230 = vmatpush2.bf16.msra.mxu0 0
          %1231 = vmatprep.subr.bf16.mxu0 0
          %1232 = vmatpush2.bf16.msra.mxu0 0
          %1233 = vmatprep.subr.bf16.mxu0 0
          %1234 = vmatpush2.bf16.msra.mxu0 0
          %1235 = vmatprep.subr.bf16.mxu0 0
          %1236 = vmatpush2.bf16.msra.mxu0 0
          %1237 = vmatprep.subr.bf16.mxu0 0
          %1238 = vmatpush2.bf16.msra.mxu0 0
          %1239 = vmatprep.subr.bf16.mxu0 0
          %1240 = vmatpush2.bf16.msra.mxu0 0
          %1241 = vmatprep.subr.bf16.mxu0 0
          %1242 = vmatpush2.bf16.msra.mxu0 0
          %1243 = vmatprep.subr.bf16.mxu0 0
          %1244 = vmatpush2.bf16.msra.mxu0 0
          %1245 = vmatprep.mubr.bf16.mxu0 0
          %1246 = vmatmul.mubr.bf16.gmra.mxu0 %v1208
          %v1247 = vpop.f32.mrf.mxu0
          %v1248 = vadd.f32 0.0, %v1247
          %v1249 = vpop.f32.mrf.mxu0
          %v1250 = vpop.f32.mrf.mxu0
          %v1251 = vpop.f32.mrf.mxu0
          %1252 = vdwg.mxu0
          %v1254 = vsel %vm910, %v1158, 0
          %v1257 = vsel %vm1163, %v908, 0
          %1259 = vmatprep.subr.bf16.mxu0 0
          %1260 = vmatpush1.bf16.msra.mxu0 0
          %1261 = vmatprep.subr.bf16.mxu0 0
          %1262 = vmatpush1.bf16.msra.mxu0 0
          %1263 = vmatprep.subr.bf16.mxu0 0
          %1264 = vmatpush1.bf16.msra.mxu0 0
          %1265 = vmatprep.subr.bf16.mxu0 0
          %1266 = vmatpush1.bf16.msra.mxu0 0
          %1267 = vmatprep.subr.bf16.mxu0 0
          %1268 = vmatpush1.bf16.msra.mxu0 0
          %1269 = vmatprep.subr.bf16.mxu0 0
          %1270 = vmatpush1.bf16.msra.mxu0 0
          %1271 = vmatprep.subr.bf16.mxu0 0
          %1272 = vmatpush1.bf16.msra.mxu0 0
          %1273 = vmatprep.subr.bf16.mxu0 0
          %1274 = vmatpush1.bf16.msra.mxu0 %v1257
          %1275 = vmatprep.subr.bf16.mxu0 0
          %1276 = vmatpush2.bf16.msra.mxu0 0
          %1277 = vmatprep.subr.bf16.mxu0 0
          %1278 = vmatpush2.bf16.msra.mxu0 0
          %1279 = vmatprep.subr.bf16.mxu0 0
          %1280 = vmatpush2.bf16.msra.mxu0 0
          %1281 = vmatprep.subr.bf16.mxu0 0
          %1282 = vmatpush2.bf16.msra.mxu0 0
          %1283 = vmatprep.subr.bf16.mxu0 0
          %1284 = vmatpush2.bf16.msra.mxu0 0
          %1285 = vmatprep.subr.bf16.mxu0 0
          %1286 = vmatpush2.bf16.msra.mxu0 0
          %1287 = vmatprep.subr.bf16.mxu0 0
          %1288 = vmatpush2.bf16.msra.mxu0 0
          %1289 = vmatprep.subr.bf16.mxu0 0
          %1290 = vmatpush2.bf16.msra.mxu0 0
          %1291 = vmatprep.mubr.bf16.mxu0 0
          %1292 = vmatmul.mubr.bf16.gmra.mxu0 %v1254
          %v1293 = vpop.f32.mrf.mxu0
          %v1294 = vadd.f32 0.0, %v1293
          %v1295 = vpop.f32.mrf.mxu0
          %v1296 = vpop.f32.mrf.mxu0
          %v1297 = vpop.f32.mrf.mxu0
          %1298 = vdwg.mxu0
          %v1300 = vsel %vm910, %v1159, 0
          %v1303 = vsel %vm1163, %v909, 0
          %1305 = vmatprep.subr.bf16.mxu0 0
          %1306 = vmatpush1.bf16.msra.mxu0 0
          %1307 = vmatprep.subr.bf16.mxu0 0
          %1308 = vmatpush1.bf16.msra.mxu0 0
          %1309 = vmatprep.subr.bf16.mxu0 0
          %1310 = vmatpush1.bf16.msra.mxu0 0
          %1311 = vmatprep.subr.bf16.mxu0 0
          %1312 = vmatpush1.bf16.msra.mxu0 0
          %1313 = vmatprep.subr.bf16.mxu0 0
          %1314 = vmatpush1.bf16.msra.mxu0 0
          %1315 = vmatprep.subr.bf16.mxu0 0
          %1316 = vmatpush1.bf16.msra.mxu0 0
          %1317 = vmatprep.subr.bf16.mxu0 0
          %1318 = vmatpush1.bf16.msra.mxu0 0
          %1319 = vmatprep.subr.bf16.mxu0 0
          %1320 = vmatpush1.bf16.msra.mxu0 %v1303
          %1321 = vmatprep.subr.bf16.mxu0 0
          %1322 = vmatpush2.bf16.msra.mxu0 0
          %1323 = vmatprep.subr.bf16.mxu0 0
          %1324 = vmatpush2.bf16.msra.mxu0 0
          %1325 = vmatprep.subr.bf16.mxu0 0
          %1326 = vmatpush2.bf16.msra.mxu0 0
          %1327 = vmatprep.subr.bf16.mxu0 0
          %1328 = vmatpush2.bf16.msra.mxu0 0
          %1329 = vmatprep.subr.bf16.mxu0 0
          %1330 = vmatpush2.bf16.msra.mxu0 0
          %1331 = vmatprep.subr.bf16.mxu0 0
          %1332 = vmatpush2.bf16.msra.mxu0 0
          %1333 = vmatprep.subr.bf16.mxu0 0
          %1334 = vmatpush2.bf16.msra.mxu0 0
          %1335 = vmatprep.subr.bf16.mxu0 0
          %1336 = vmatpush2.bf16.msra.mxu0 0
          %1337 = vmatprep.mubr.bf16.mxu0 0
          %1338 = vmatmul.mubr.bf16.gmra.mxu0 %v1300
          %v1339 = vpop.f32.mrf.mxu0
          %v1340 = vadd.f32 0.0, %v1339
          %v1341 = vpop.f32.mrf.mxu0
          %v1342 = vpop.f32.mrf.mxu0
          %v1343 = vpop.f32.mrf.mxu0
          %1344 = vdwg.mxu0
          %1346 = vrot.lane.b32.xlu0 %v1248, 8
          %v1347 = vpop.permute.xlu0 %1346
          %1350 = vrot.lane.b32.xlu0 %v1294, 16
          %v1351 = vpop.permute.xlu0 %1350
          %1354 = vrot.lane.b32.xlu0 %v1340, 24
          %v1355 = vpop.permute.xlu0 %1354
          %v1357 = vsel %vm910, %v1202, %v1347
          %vm1358 = vcmask 130048
          %v1359 = vsel %vm1358, %v1357, %v1351
          %vm1360 = vcmask 195584
          %v1361 = vsel %vm1360, %v1359, %v1355
          %v1362 = vpack.c.bf16 %v1361, %v1361
          %v1363 = vld [vmem:[%s8] sm:$0xf]
          %v1364 = vld [vmem:[%s8 + $0x4] sm:$0xf]
          %v1365 = vld [vmem:[%s8 + $0x8] sm:$0xf]
          %v1366 = vld [vmem:[%s8 + $0xc] sm:$0xf]
          %v1367 = vld [vmem:[#allocation11] sm:$0x1]
          %v1369 = vlaneseq
          %v1370 = vshrl.u32 %v1369, 7
          %v1371 = vsub.s32 0, %v1370
          %v1372 = vrot.slane %v1367, %v1371
          %v1378 = vunpack.c.l.b16 %v1363
          %v1379 = vunpack.c.l.b16 %v1364
          %v1380 = vunpack.c.l.b16 %v1365
          %v1381 = vunpack.c.l.b16 %v1366
          %v1382 = vpack.c.b16 %v1379, %v1378
          %v1383 = vpack.c.b16 %v1381, %v1380
          %v1387 = vsel %vm627, %v1362, 0
          %1389 = vmatprep.subr.bf16.mxu0 0
          %1390 = vmatpush1.bf16.msra.mxu0 0
          %1391 = vmatprep.subr.bf16.mxu0 0
          %1392 = vmatpush1.bf16.msra.mxu0 0
          %1393 = vmatprep.subr.bf16.mxu0 0
          %1394 = vmatpush1.bf16.msra.mxu0 0
          %1395 = vmatprep.subr.bf16.mxu0 0
          %1396 = vmatpush1.bf16.msra.mxu0 0
          %1397 = vmatprep.subr.bf16.mxu0 0
          %1398 = vmatpush1.bf16.msra.mxu0 0
          %1399 = vmatprep.subr.bf16.mxu0 0
          %1400 = vmatpush1.bf16.msra.mxu0 0
          %1401 = vmatprep.subr.bf16.mxu0 0
          %1402 = vmatpush1.bf16.msra.mxu0 %v1383
          %1403 = vmatprep.subr.bf16.mxu0 0
          %1404 = vmatpush1.bf16.msra.mxu0 %v1382
          %1405 = vmatprep.subr.bf16.mxu0 0
          %1406 = vmatpush2.bf16.msra.mxu0 0
          %1407 = vmatprep.subr.bf16.mxu0 0
          %1408 = vmatpush2.bf16.msra.mxu0 0
          %1409 = vmatprep.subr.bf16.mxu0 0
          %1410 = vmatpush2.bf16.msra.mxu0 0
          %1411 = vmatprep.subr.bf16.mxu0 0
          %1412 = vmatpush2.bf16.msra.mxu0 0
          %1413 = vmatprep.subr.bf16.mxu0 0
          %1414 = vmatpush2.bf16.msra.mxu0 0
          %1415 = vmatprep.subr.bf16.mxu0 0
          %1416 = vmatpush2.bf16.msra.mxu0 0
          %1417 = vmatprep.subr.bf16.mxu0 0
          %1418 = vmatpush2.bf16.msra.mxu0 0
          %1419 = vmatprep.subr.bf16.mxu0 0
          %1420 = vmatpush2.bf16.msra.mxu0 0
          %1421 = vmatprep.mubr.bf16.mxu0 0
          %1422 = vmatmul.mubr.bf16.gmra.mxu0 %v1387
          %v1423 = vpop.f32.mrf.mxu0
          %v1424 = vadd.f32 %v1372, %v1423
          %v1425 = vpop.f32.mrf.mxu0
          %v1426 = vpop.f32.mrf.mxu0
          %v1427 = vpop.f32.mrf.mxu0
          %1428 = vdwg.mxu0
          %v1429 = vadd.f32 %v624, %v1424
          %1430 = vst.msk [vmem:[#allocation2] sm:$0xff] %vm627, %v1429
        $region108: #{tpu_custom_call.1} parent=87 // pred_fallthru
          _
        %p1431 = scmp.ne.s32.totalorder %s616, 0
        // Predicated region
        $region109: #{tpu_custom_call.1} parent=87 // pred_check
          %p1432 = pneg %p1431
        $region110: #{tpu_custom_call.1} parent=87 // pred_check_branch
          %1434 = sbr.rel (%p1432) target = $region112
        $region111: #{tpu_custom_call.1} parent=87 // pred_region
          %s1435 = scalar_lea.vmem %s613, %s615
          %v1436 = vld [vmem:[%s1435] sm:$0xff]
          %vm1437 = vcmask 261120
          %1438 = vst.msk [vmem:[#allocation2] sm:$0xff] %vm1437, %v1436
        $region112: #{tpu_custom_call.1} parent=87 // pred_fallthru
          _
        %p1439 = scmp.eq.s32.totalorder %s617, 0
        // Predicated region
        $region113: #{tpu_custom_call.1} parent=87 // pred_check
          %p1440 = pneg %p1439
        $region114: #{tpu_custom_call.1} parent=87 // pred_check_branch
          %1442 = sbr.rel (%p1440) target = $region116
        $region115: #{tpu_custom_call.1} parent=87 // pred_region
          %v1443 = vld [vmem:[#allocation2] sm:$0xff]
          %v1444 = vld [vmem:[%s12] sm:$0x1]
          %v1445 = vld [vmem:[%s13] sm:$0x1]
          %vm1446 = vcmask 261120
          %v1447 = vsel %vm1446, %v1443, 0.0
          %1448 = vadd.xlane.f32.xlu0 %v1447
          %v1449 = vpop.xlane.xlu0 %1448
          %v1450 = vrcp.pop 32.0
          %v1451 = vmul.f32 %v1449, %v1450
          %v1452 = vsub.f32 %v1443, %v1451
          %v1453 = vmul.f32 %v1452, %v1452
          %v1454 = vsel %vm1446, %v1453, 0.0
          %1455 = vadd.xlane.f32.xlu0 %v1454
          %v1456 = vpop.xlane.xlu0 %1455
          %v1457 = vmul.f32 %v1456, %v1450
          %v1458 = vadd.f32 %v1457, 1e-05
          %v1459 = vrsqrt.pop %v1458
          %v1460 = vmul.f32 %v1452, %v1459
          %v1462 = vlaneseq
          %v1463 = vshrl.u32 %v1462, 7
          %v1464 = vsub.s32 0, %v1463
          %v1465 = vrot.slane %v1444, %v1464
          %v1467 = vmul.f32 %v1460, %v1465
          %v1469 = vlaneseq
          %v1470 = vshrl.u32 %v1469, 7
          %v1471 = vsub.s32 0, %v1470
          %v1472 = vrot.slane %v1445, %v1471
          %v1474 = vadd.f32 %v1467, %v1472
          %v1475 = vpack.c.bf16 %v1474, %v1474
          %v1476 = vld [vmem:[%s14] sm:$0xf]
          %v1477 = vld [vmem:[%s14 + $0x4] sm:$0xf]
          %v1478 = vld [vmem:[%s14 + $0x8] sm:$0xf]
          %v1479 = vld [vmem:[%s14 + $0xc] sm:$0xf]
          %v1480 = vld [vmem:[%s15] sm:$0x1]
          %v1482 = vlaneseq
          %v1483 = vshrl.u32 %v1482, 7
          %v1484 = vsub.s32 0, %v1483
          %v1485 = vrot.slane %v1480, %v1484
          %v1491 = vunpack.c.l.b16 %v1476
          %v1492 = vunpack.c.l.b16 %v1477
          %v1493 = vunpack.c.l.b16 %v1478
          %v1494 = vunpack.c.l.b16 %v1479
          %v1495 = vpack.c.b16 %v1492, %v1491
          %v1496 = vpack.c.b16 %v1494, %v1493
          %v1500 = vsel %vm1446, %v1475, 0
          %1502 = vmatprep.subr.bf16.mxu0 0
          %1503 = vmatpush1.bf16.msra.mxu0 0
          %1504 = vmatprep.subr.bf16.mxu0 0
          %1505 = vmatpush1.bf16.msra.mxu0 0
          %1506 = vmatprep.subr.bf16.mxu0 0
          %1507 = vmatpush1.bf16.msra.mxu0 0
          %1508 = vmatprep.subr.bf16.mxu0 0
          %1509 = vmatpush1.bf16.msra.mxu0 0
          %1510 = vmatprep.subr.bf16.mxu0 0
          %1511 = vmatpush1.bf16.msra.mxu0 0
          %1512 = vmatprep.subr.bf16.mxu0 0
          %1513 = vmatpush1.bf16.msra.mxu0 0
          %1514 = vmatprep.subr.bf16.mxu0 0
          %1515 = vmatpush1.bf16.msra.mxu0 %v1496
          %1516 = vmatprep.subr.bf16.mxu0 0
          %1517 = vmatpush1.bf16.msra.mxu0 %v1495
          %1518 = vmatprep.subr.bf16.mxu0 0
          %1519 = vmatpush2.bf16.msra.mxu0 0
          %1520 = vmatprep.subr.bf16.mxu0 0
          %1521 = vmatpush2.bf16.msra.mxu0 0
          %1522 = vmatprep.subr.bf16.mxu0 0
          %1523 = vmatpush2.bf16.msra.mxu0 0
          %1524 = vmatprep.subr.bf16.mxu0 0
          %1525 = vmatpush2.bf16.msra.mxu0 0
          %1526 = vmatprep.subr.bf16.mxu0 0
          %1527 = vmatpush2.bf16.msra.mxu0 0
          %1528 = vmatprep.subr.bf16.mxu0 0
          %1529 = vmatpush2.bf16.msra.mxu0 0
          %1530 = vmatprep.subr.bf16.mxu0 0
          %1531 = vmatpush2.bf16.msra.mxu0 0
          %1532 = vmatprep.subr.bf16.mxu0 0
          %1533 = vmatpush2.bf16.msra.mxu0 0
          %1534 = vmatprep.mubr.bf16.mxu0 0
          %1535 = vmatmul.mubr.bf16.gmra.mxu0 %v1500
          %v1536 = vpop.f32.mrf.mxu0
          %v1537 = vadd.f32 %v1485, %v1536
          %v1538 = vpop.f32.mrf.mxu0
          %v1539 = vpop.f32.mrf.mxu0
          %v1540 = vpop.f32.mrf.mxu0
          %1541 = vdwg.mxu0
          %v1542 = vmul.f32 %v1537, 0.5
          %v1543 = vmul.f32 %v1537, 0.044715
          %v1544 = vmul.f32 %v1543, %v1537
          %v1545 = vmul.f32 %v1544, %v1537
          %v1546 = vadd.f32 %v1537, %v1545
          %v1547 = vmul.f32 %v1546, 0.7978846
          %v1548 = vtanh.pop %v1547
          %v1549 = vadd.f32 %v1548, 1.0
          %v1550 = vmul.f32 %v1542, %v1549
          %v1551 = vpack.c.bf16 %v1550, %v1550
          %v1552 = vld [vmem:[%s16] sm:$0xf]
          %v1553 = vld [vmem:[%s16 + $0x4] sm:$0xf]
          %v1554 = vld [vmem:[%s16 + $0x8] sm:$0xf]
          %v1555 = vld [vmem:[%s16 + $0xc] sm:$0xf]
          %v1556 = vld [vmem:[%s16 + $0x10] sm:$0xf]
          %v1557 = vld [vmem:[%s16 + $0x14] sm:$0xf]
          %v1558 = vld [vmem:[%s16 + $0x18] sm:$0xf]
          %v1559 = vld [vmem:[%s16 + $0x1c] sm:$0xf]
          %v1560 = vld [vmem:[%s16 + $0x20] sm:$0xf]
          %v1561 = vld [vmem:[%s16 + $0x24] sm:$0xf]
          %v1562 = vld [vmem:[%s16 + $0x28] sm:$0xf]
          %v1563 = vld [vmem:[%s16 + $0x2c] sm:$0xf]
          %v1564 = vld [vmem:[%s16 + $0x30] sm:$0xf]
          %v1565 = vld [vmem:[%s16 + $0x34] sm:$0xf]
          %v1566 = vld [vmem:[%s16 + $0x38] sm:$0xf]
          %v1567 = vld [vmem:[%s16 + $0x3c] sm:$0xf]
          %v1568 = vld [vmem:[%s17] sm:$0x1]
          %v1570 = vlaneseq
          %v1571 = vshrl.u32 %v1570, 7
          %v1572 = vsub.s32 0, %v1571
          %v1573 = vrot.slane %v1568, %v1572
          %v1591 = vunpack.c.l.b16 %v1552
          %v1592 = vunpack.c.l.b16 %v1553
          %v1593 = vunpack.c.l.b16 %v1554
          %v1594 = vunpack.c.l.b16 %v1555
          %v1595 = vunpack.c.l.b16 %v1556
          %v1596 = vunpack.c.l.b16 %v1557
          %v1597 = vunpack.c.l.b16 %v1558
          %v1598 = vunpack.c.l.b16 %v1559
          %v1599 = vunpack.c.l.b16 %v1560
          %v1600 = vunpack.c.l.b16 %v1561
          %v1601 = vunpack.c.l.b16 %v1562
          %v1602 = vunpack.c.l.b16 %v1563
          %v1603 = vunpack.c.l.b16 %v1564
          %v1604 = vunpack.c.l.b16 %v1565
          %v1605 = vunpack.c.l.b16 %v1566
          %v1606 = vunpack.c.l.b16 %v1567
          %v1607 = vpack.c.b16 %v1592, %v1591
          %v1608 = vpack.c.b16 %v1594, %v1593
          %v1609 = vpack.c.b16 %v1596, %v1595
          %v1610 = vpack.c.b16 %v1598, %v1597
          %v1611 = vpack.c.b16 %v1600, %v1599
          %v1612 = vpack.c.b16 %v1602, %v1601
          %v1613 = vpack.c.b16 %v1604, %v1603
          %v1614 = vpack.c.b16 %v1606, %v1605
          %1623 = vmatprep.subr.bf16.mxu0 0
          %1624 = vmatpush1.bf16.msra.mxu0 %v1614
          %1625 = vmatprep.subr.bf16.mxu0 0
          %1626 = vmatpush1.bf16.msra.mxu0 %v1613
          %1627 = vmatprep.subr.bf16.mxu0 0
          %1628 = vmatpush1.bf16.msra.mxu0 %v1612
          %1629 = vmatprep.subr.bf16.mxu0 0
          %1630 = vmatpush1.bf16.msra.mxu0 %v1611
          %1631 = vmatprep.subr.bf16.mxu0 0
          %1632 = vmatpush1.bf16.msra.mxu0 %v1610
          %1633 = vmatprep.subr.bf16.mxu0 0
          %1634 = vmatpush1.bf16.msra.mxu0 %v1609
          %1635 = vmatprep.subr.bf16.mxu0 0
          %1636 = vmatpush1.bf16.msra.mxu0 %v1608
          %1637 = vmatprep.subr.bf16.mxu0 0
          %1638 = vmatpush1.bf16.msra.mxu0 %v1607
          %1639 = vmatprep.subr.bf16.mxu0 0
          %1640 = vmatpush2.bf16.msra.mxu0 0
          %1641 = vmatprep.subr.bf16.mxu0 0
          %1642 = vmatpush2.bf16.msra.mxu0 0
          %1643 = vmatprep.subr.bf16.mxu0 0
          %1644 = vmatpush2.bf16.msra.mxu0 0
          %1645 = vmatprep.subr.bf16.mxu0 0
          %1646 = vmatpush2.bf16.msra.mxu0 0
          %1647 = vmatprep.subr.bf16.mxu0 0
          %1648 = vmatpush2.bf16.msra.mxu0 0
          %1649 = vmatprep.subr.bf16.mxu0 0
          %1650 = vmatpush2.bf16.msra.mxu0 0
          %1651 = vmatprep.subr.bf16.mxu0 0
          %1652 = vmatpush2.bf16.msra.mxu0 0
          %1653 = vmatprep.subr.bf16.mxu0 0
          %1654 = vmatpush2.bf16.msra.mxu0 0
          %1655 = vmatprep.mubr.bf16.mxu0 0
          %1656 = vmatmul.mubr.bf16.gmra.mxu0 %v1551
          %v1657 = vpop.f32.mrf.mxu0
          %v1658 = vadd.f32 %v1573, %v1657
          %v1659 = vpop.f32.mrf.mxu0
          %v1660 = vpop.f32.mrf.mxu0
          %v1661 = vpop.f32.mrf.mxu0
          %1662 = vdwg.mxu0
          %v1663 = vadd.f32 %v1443, %v1658
          %1664 = vst.msk [vmem:[%s609] sm:$0xff] %vm1446, %v1663
        $region116: #{tpu_custom_call.1} parent=87 // pred_fallthru
          _
        %p1665 = scmp.ne.s32.totalorder %s617, 0
        // Predicated region
        $region117: #{tpu_custom_call.1} parent=87 // pred_check
          %p1666 = pneg %p1665
        $region118: #{tpu_custom_call.1} parent=87 // pred_check_branch
          %1668 = sbr.rel (%p1666) target = $region120
        $region119: #{tpu_custom_call.1} parent=87 // pred_region
          %v1669 = vld [vmem:[#allocation2] sm:$0xff]
          %vm1670 = vcmask 261120
          %1671 = vst.msk [vmem:[%s609] sm:$0xff] %vm1670, %v1669
        $region120: #{tpu_custom_call.1} parent=87 // pred_fallthru
          _
        %s1672 = sand.u32 %s423, 1
        %s1673 = scalar_lea.sflag [#allocation7], %s1672
        %s1674 = sand.u32 %s423, 1
        %s1675 = smul.addr %s1674, 8
        %s1676 = scalar_lea.vmem [#allocation13], %s1675
        // Predicated region
        $region121: #{tpu_custom_call.1} parent=87 // pred_check
          %p1677 = pneg %p433
        $region122: #{tpu_custom_call.1} parent=87 // pred_check_branch
          %1679 = sbr.rel (%p1677) target = $region124
        $region123: #{tpu_custom_call.1} parent=87 // pred_region
          %s1681 = ssub.s32 128, 128
          %1682 = vsyncadd %s1673, %s1681
          %s1683 = sadd.s32 %s44, %s43
          %s1684 = smul.addr %s1683, 128
          %s1685 = scalar_lea.hbm %s18, %s1684
          %s1687 = sshll.u32 %s1676, 4
          %s1688 = int_to_ptr.vmem [resolvable:$true] %s1687
          %1690 = dma.vmem_to_hbm [thread:$0]  %s1688, 128, %s1685, %s1673
        $region124: #{tpu_custom_call.1} parent=87 // pred_fallthru
          _
      $region88: #{tpu_custom_call.1} parent=5 // pred_fallthru
        _
      %p1691 = scmp.le.s32.totalorder 2, %s34
      // Predicated region
      $region125: #{tpu_custom_call.1} parent=5 // pred_check
        %p1692 = pneg %p1691
      $region126: #{tpu_custom_call.1} parent=5 // pred_check_branch
        %1694 = sbr.rel (%p1692) target = $region128
      $region127: #{tpu_custom_call.1} parent=5 // pred_region
        %s1695 = ssub.s32 %s34, 2
        // Predicated region
        $region129: #{tpu_custom_call.1} parent=127 // pred_check
          %p1696 = pneg %p439
        $region130: #{tpu_custom_call.1} parent=127 // pred_check_branch
          %1698 = sbr.rel (%p1696) target = $region132
        $region131: #{tpu_custom_call.1} parent=127 // pred_region
          %s1699 = sand.u32 %s424, 1
          %s1700 = scalar_lea.sflag [#allocation7], %s1699
          %s1701 = sand.u32 %s424, 1
          %s1702 = smul.addr %s1701, 8
          %s1703 = scalar_lea.vmem [#allocation13], %s1702
          %1704 = dma.done %s1700, 128
        $region132: #{tpu_custom_call.1} parent=127 // pred_fallthru
          _
      $region128: #{tpu_custom_call.1} parent=5 // pred_fallthru
        _
    $region6: #{tpu_custom_call.1} parent=1 // loop_footer
      %s38 = sadd.s32 1, %s34
    $region7: #{tpu_custom_call.1} parent=1 // loop_footer_branch
      %33 = sbr.rel target = $region3
    $region8: #{tpu_custom_call.1} parent=1 // loop_exit
      _
    %1705 = vsyncpa [#allocation6], 1
    %s1706 = scalar_lea.sflag [#allocation6], 1
    %1707 = vsyncpa %s1706, 1
    %1708 = vsyncpa [#allocation9], 1
    %1709 = vsyncpa [#allocation12], 1
    %1710 = vsyncpa [#allocation7], 1
    %s1711 = scalar_lea.sflag [#allocation7], 1
    %1712 = vsyncpa %s1711, 1

</llo_original>
